<compile_context>
chip_gen: v5e
topology: v5e:2x2
jax: 0.10.0
libtpu: 0.0.40
codegen_flags: <defaults>
</compile_context>

<pallas_src>
import functools

import jax
import jax.numpy as jnp
from jax.experimental import pallas as pl
from jax.experimental.pallas import tpu as pltpu


def milstm_chunk_kernel(gx_ref,                               # (TB, 4H) precomputed x-side gates
                        h0_ref, c0_ref,                       # (1, H) initial state
                        wh_ref, bh_ref,                       # (H, 4H), (1, 4H)
                        alpha_ref, beta1_ref, beta2_ref,      # (1, 4H) MI params (gate-stacked)
                        wd_ref, bd_ref,                       # (H, OP), (1, OP) decoder (lane-padded)
                        out_ref,                              # (TB, OP) decoder rows of this chunk
                        hT_ref, cT_ref,                       # (1, H) resident carried / final state
                        hbuf_ref,                             # (TB, H) VMEM scratch of per-step hx
                        *, T):
    chunk = pl.program_id(0)
    TB = gx_ref.shape[0]
    H = hT_ref.shape[-1]

    # First chunk: seed the resident (accumulator-style) output blocks with h0/c0.
    @pl.when(chunk == 0)
    def _():
        hT_ref[...] = h0_ref[...]
        cT_ref[...] = c0_ref[...]

    h = hT_ref[...]                                           # (1, H)
    c = cT_ref[...]

    # Hoisted loop invariants (avoid TB copies of the same broadcast / iota).
    wh = wh_ref[...]
    bh = bh_ref[...]
    alpha = alpha_ref[...]
    beta1 = beta1_ref[...]
    beta2 = beta2_ref[...]
    lane = jax.lax.broadcasted_iota(jnp.int32, (1, 4 * H), 1)
    is_z = lane >= 3 * H                                      # tanh lanes (z); sigmoid elsewhere

    def step(i, carry):
        h, c = carry
        gx = gx_ref[pl.ds(i, 1), :]                                          # (1, 4H)
        gh = jnp.dot(h, wh, preferred_element_type=jnp.float32) + bh         # (1, 4H)

        # Multiplicative-integration pre-activation, dense over all 4 gates.
        pre = alpha * gx * gh + beta1 * gx + beta2 * gh                      # (1, 4H)

        # Single EUP pass: tanh(x) = 2*sigmoid(2x) - 1 on the z-gate lanes.
        sg = jax.nn.sigmoid(jnp.where(is_z, 2.0 * pre, pre))
        gates = jnp.where(is_z, 2.0 * sg - 1.0, sg)                          # (1, 4H)

        f_g = gates[:, 0 * H:1 * H]
        i_g = gates[:, 1 * H:2 * H]
        o_g = gates[:, 2 * H:3 * H]
        z_t = gates[:, 3 * H:4 * H]

        cx = f_g * c + i_g * z_t
        hx = o_g * jnp.tanh(cx)

        hbuf_ref[pl.ds(i, 1), :] = hx          # decoder input row (junk tail rows sliced off)

        if T % TB == 0:                        # static: mask compiled out when not needed
            return hx, cx
        valid = (chunk * TB + i) < T           # padded tail tokens: freeze carried state
        return jnp.where(valid, hx, h), jnp.where(valid, cx, c)

    h, c = jax.lax.fori_loop(0, TB, step, (h, c), unroll=True)

    hT_ref[...] = h
    cT_ref[...] = c

    # One lane-dense (TB, H) @ (H, OP) decoder matmul per chunk (full vst stores).
    out_ref[...] = (jnp.dot(hbuf_ref[...], wd_ref[...],
                            preferred_element_type=jnp.float32)
                    + bd_ref[...]).astype(out_ref.dtype)


def milstm_sequence(ids, h0, c0, kp, tb=8):
    """Run the miLSTM recurrence over a whole token sequence in ONE pallas_call.

    ids: (T,) int32; h0, c0: (1, H).
    Returns (out: (T, O), h_T: (1, H), c_T: (1, H)).
    """
    T = int(ids.shape[0])
    H = int(h0.shape[-1])
    OP = int(kp["wd"].shape[-1])               # lane-dense (padded) decoder width
    O = int(kp["out_size"])
    TB = int(tb)
    n_chunks = (T + TB - 1) // TB
    T_pad = n_chunks * TB

    # x-side projection has no recurrent dependency: hoist gather + matmul out of the
    # serial loop (runs at M=T instead of M=1 and keeps the embedding out of VMEM).
    x = jnp.take(kp["embed"], ids, axis=0)                    # (T, E)
    gx = x @ kp["wx"] + kp["bx"]                              # (T, 4H)
    if T_pad != T:
        gx = jnp.pad(gx, ((0, T_pad - T), (0, 0)))

    res = lambda t: (0, 0)                                    # resident operands: same block every step

    grid_spec = pltpu.PrefetchScalarGridSpec(
        num_scalar_prefetch=0,
        grid=(n_chunks,),
        in_specs=[
            pl.BlockSpec((TB, 4 * H), lambda t: (t, 0)),      # gx chunk
            pl.BlockSpec((1, H), res),                        # h0
            pl.BlockSpec((1, H), res),                        # c0
            pl.BlockSpec((H, 4 * H), res),                    # wh (gate-stacked f,i,o,z)
            pl.BlockSpec((1, 4 * H), res),                    # bh
            pl.BlockSpec((1, 4 * H), res),                    # alpha
            pl.BlockSpec((1, 4 * H), res),                    # beta1
            pl.BlockSpec((1, 4 * H), res),                    # beta2
            pl.BlockSpec((H, OP), res),                       # wd (lane-padded)
            pl.BlockSpec((1, OP), res),                       # bd (lane-padded)
        ],
        out_specs=(
            pl.BlockSpec((TB, OP), lambda t: (t, 0)),         # decoder rows per chunk
            pl.BlockSpec((1, H), res),                        # h_T (carried state, P3)
            pl.BlockSpec((1, H), res),                        # c_T (carried state, P3)
        ),
        scratch_shapes=[pltpu.VMEM((TB, H), jnp.float32)],    # per-chunk hx rows
    )

    out_pad, h_t, c_t = pl.pallas_call(
        functools.partial(milstm_chunk_kernel, T=T),
        out_shape=(
            jax.ShapeDtypeStruct((T_pad, OP), jnp.float32),
            jax.ShapeDtypeStruct((1, H), jnp.float32),
            jax.ShapeDtypeStruct((1, H), jnp.float32),
        ),
        grid_spec=grid_spec,
        compiler_params=pltpu.CompilerParams(
            dimension_semantics=("arbitrary",)),              # sequential carry over time
    )(gx, h0, c0,
      kp["wh"], kp["bh"], kp["alpha"], kp["beta1"], kp["beta2"],
      kp["wd"], kp["bd"])

    return out_pad[:T, :O], h_t, c_t


def milstm_forward(inp_id, h0, c0, kp):
    """Single-step forward with the semantics of miLSTM.forward(inp, h_0, c_0)."""
    return milstm_sequence(jnp.reshape(inp_id, (1,)).astype(jnp.int32), h0, c0, kp)


# --------------------------- parameters & reference ---------------------------

def init_params(key, input_size, hidden_size, embed_size, output_size):
    """Parameters mirroring the PyTorch module (per-gate Linear layers)."""
    V, H, E, O = input_size, hidden_size, embed_size, output_size
    ks = jax.random.split(key, 13)
    s = 0.1

    def linear(k, d_in, d_out):
        kw, kb = jax.random.split(k)
        # nn.Linear stores W as (out, in); we store W.T -> (in, out): y = x @ W + b
        return (s * jax.random.normal(kw, (d_in, d_out), jnp.float32),
                s * jax.random.normal(kb, (1, d_out), jnp.float32))

    p = {}
    p["wfx"], p["bfx"] = linear(ks[0], E, H)
    p["wix"], p["bix"] = linear(ks[1], E, H)
    p["wox"], p["box"] = linear(ks[2], E, H)
    p["wzx"], p["bzx"] = linear(ks[3], E, H)
    p["wfh"], p["bfh"] = linear(ks[4], H, H)
    p["wih"], p["bih"] = linear(ks[5], H, H)
    p["woh"], p["boh"] = linear(ks[6], H, H)
    p["wzh"], p["bzh"] = linear(ks[7], H, H)
    p["wd"], p["bd"] = linear(ks[8], H, O)
    p["embed"] = s * jax.random.normal(ks[9], (V, E), jnp.float32)
    # alpha/beta are ones in the PyTorch init; perturb so any layout bug is caught.
    p["alpha"] = 1.0 + 0.1 * jax.random.normal(ks[10], (4, H), jnp.float32)
    p["beta1"] = 1.0 + 0.1 * jax.random.normal(ks[11], (4, H), jnp.float32)
    p["beta2"] = 1.0 + 0.1 * jax.random.normal(ks[12], (4, H), jnp.float32)
    return p


def pack_params(p, lane_pad=128):
    """Pack per-gate params into the kernel layout (gate order f, i, o, z)."""
    H = p["wfh"].shape[0]
    O = p["wd"].shape[1]
    OP = ((O + lane_pad - 1) // lane_pad) * lane_pad

    wx = jnp.concatenate([p["wfx"], p["wix"], p["wox"], p["wzx"]], axis=1)  # (E, 4H)
    wh = jnp.concatenate([p["wfh"], p["wih"], p["woh"], p["wzh"]], axis=1)  # (H, 4H)
    bx = jnp.concatenate([p["bfx"], p["bix"], p["box"], p["bzx"]], axis=1)  # (1, 4H)
    bh = jnp.concatenate([p["bfh"], p["bih"], p["boh"], p["bzh"]], axis=1)  # (1, 4H)

    wd = jnp.zeros((H, OP), jnp.float32).at[:, :O].set(p["wd"])             # lane-dense
    bd = jnp.zeros((1, OP), jnp.float32).at[:, :O].set(p["bd"])

    # TODO(synk): at real (non-toy) sizes store wx/wh/wd/embed in bfloat16 for v6e/v7x
    # (keep preferred_element_type=f32 on the dots); kept f32 here so the check against
    # the f32 reference stays tight.
    return dict(
        embed=p["embed"],                        # (V, E): gathered in plain XLA now
        wx=wx, bx=bx, wh=wh, bh=bh,
        alpha=p["alpha"].reshape(1, 4 * H),
        beta1=p["beta1"].reshape(1, 4 * H),
        beta2=p["beta2"].reshape(1, 4 * H),
        wd=wd, bd=bd,
        out_size=O,
    )


def reference_forward(ids, h0, c0, p):
    """Pure-JAX per-step reference mirroring the PyTorch miLSTM.forward."""
    h, c = h0, c0
    outs = []
    for t in range(ids.shape[0]):
        x = p["embed"][ids[t]][None, :]                                   # (1, E)

        def gate(wx_, bx_, wh_, bh_, a, b1, b2):
            gx = x @ wx_ + bx_
            gh = h @ wh_ + bh_
            return a * gx * gh + b1 * gx + b2 * gh

        f_g = jax.nn.sigmoid(gate(p["wfx"], p["bfx"], p["wfh"], p["bfh"],
                                  p["alpha"][0:1], p["beta1"][0:1], p["beta2"][0:1]))
        i_g = jax.nn.sigmoid(gate(p["wix"], p["bix"], p["wih"], p["bih"],
                                  p["alpha"][1:2], p["beta1"][1:2], p["beta2"][1:2]))
        o_g = jax.nn.sigmoid(gate(p["wox"], p["box"], p["woh"], p["boh"],
                                  p["alpha"][2:3], p["beta1"][2:3], p["beta2"][2:3]))
        z_t = jnp.tanh(gate(p["wzx"], p["bzx"], p["wzh"], p["bzh"],
                            p["alpha"][3:4], p["beta1"][3:4], p["beta2"][3:4]))
        c = f_g * c + i_g * z_t
        h = o_g * jnp.tanh(c)
        outs.append(h @ p["wd"] + p["bd"])
    return jnp.concatenate(outs, axis=0), h, c


if __name__ == "__main__":
    V, H, E, O, T = 64, 32, 16, 10, 8   # vocab, hidden, embed, output, seq len

    key = jax.random.PRNGKey(0)
    k_par, k_ids, k_h, k_c, k_ids2 = jax.random.split(key, 5)
    raw = init_params(k_par, V, H, E, O)
    packed = pack_params(raw)

    ids = jax.random.randint(k_ids, (T,), 0, V, dtype=jnp.int32)
    h0 = 0.1 * jax.random.normal(k_h, (1, H), jnp.float32)
    c0 = 0.1 * jax.random.normal(k_c, (1, H), jnp.float32)

    # Fused whole-sequence decode (one pallas_call, one chunk of 8 tokens).
    out, h_t, c_t = milstm_sequence(ids, h0, c0, packed)
    jax.block_until_ready((out, h_t, c_t))

    ref_out, ref_h, ref_c = reference_forward(ids, h0, c0, raw)
    assert out.shape == (T, O)
    assert jnp.allclose(out, ref_out, atol=1e-4, rtol=1e-4), "decoder output mismatch"
    assert jnp.allclose(h_t, ref_h, atol=1e-4, rtol=1e-4), "h_T mismatch"
    assert jnp.allclose(c_t, ref_c, atol=1e-4, rtol=1e-4), "c_T mismatch"

    # Single-step call (exact semantics of the PyTorch module's forward); exercises
    # the padded/masked tail path (T=1 < TB=8).
    out1, hx1, cx1 = milstm_forward(ids[:1], h0, c0, packed)
    ref1_out, ref1_h, ref1_c = reference_forward(ids[:1], h0, c0, raw)
    jax.block_until_ready((out1, hx1, cx1))
    assert jnp.allclose(out1, ref1_out, atol=1e-4, rtol=1e-4), "single-step mismatch"
    assert jnp.allclose(hx1, ref1_h, atol=1e-4, rtol=1e-4)
    assert jnp.allclose(cx1, ref1_c, atol=1e-4, rtol=1e-4)

    # Ragged multi-chunk sequence (T=11 -> 2 chunks, last one partial).
    T2 = 11
    ids2 = jax.random.randint(k_ids2, (T2,), 0, V, dtype=jnp.int32)
    out2, h2, c2 = milstm_sequence(ids2, h0, c0, packed)
    jax.block_until_ready((out2, h2, c2))
    ref2_out, ref2_h, ref2_c = reference_forward(ids2, h0, c0, raw)
    assert out2.shape == (T2, O)
    assert jnp.allclose(out2, ref2_out, atol=1e-4, rtol=1e-4), "ragged output mismatch"
    assert jnp.allclose(h2, ref2_h, atol=1e-4, rtol=1e-4), "ragged h_T mismatch"
    assert jnp.allclose(c2, ref2_c, atol=1e-4, rtol=1e-4), "ragged c_T mismatch"

    print("KERNEL_OK")
</pallas_src>

<mosaic_0001>
module attributes {stable_mosaic.version = 11 : i64} {
  func.func @milstm_chunk_kernel(%arg0: i32, %arg1: memref<8x128xf32, #tpu.memory_space<vmem>>, %arg2: memref<1x32xf32, #tpu.memory_space<vmem>>, %arg3: memref<1x32xf32, #tpu.memory_space<vmem>>, %arg4: memref<32x128xf32, #tpu.memory_space<vmem>>, %arg5: memref<1x128xf32, #tpu.memory_space<vmem>>, %arg6: memref<1x128xf32, #tpu.memory_space<vmem>>, %arg7: memref<1x128xf32, #tpu.memory_space<vmem>>, %arg8: memref<1x128xf32, #tpu.memory_space<vmem>>, %arg9: memref<32x128xf32, #tpu.memory_space<vmem>>, %arg10: memref<1x128xf32, #tpu.memory_space<vmem>>, %arg11: memref<8x128xf32, #tpu.memory_space<vmem>>, %arg12: memref<1x32xf32, #tpu.memory_space<vmem>>, %arg13: memref<1x32xf32, #tpu.memory_space<vmem>>, %arg14: memref<8x32xf32, #tpu.memory_space<vmem>>) attributes {dimension_semantics = [#tpu.dimension_semantics<arbitrary>], iteration_bounds = array<i64: 1>, scalar_prefetch = 0 : i64, scratch_operands = 1 : i64, tpu.core_type = #tpu.core_type<tc>, window_params = [{transform_indices = @transform_0, window_bounds = array<i64: 8, 128>}, {pipeline_mode = #tpu.pipeline_mode<synchronous>, transform_indices = @transform_1, window_bounds = array<i64: 1, 32>}, {pipeline_mode = #tpu.pipeline_mode<synchronous>, transform_indices = @transform_2, window_bounds = array<i64: 1, 32>}, {pipeline_mode = #tpu.pipeline_mode<synchronous>, transform_indices = @transform_3, window_bounds = array<i64: 32, 128>}, {pipeline_mode = #tpu.pipeline_mode<synchronous>, transform_indices = @transform_4, window_bounds = array<i64: 1, 128>}, {pipeline_mode = #tpu.pipeline_mode<synchronous>, transform_indices = @transform_5, window_bounds = array<i64: 1, 128>}, {pipeline_mode = #tpu.pipeline_mode<synchronous>, transform_indices = @transform_6, window_bounds = array<i64: 1, 128>}, {pipeline_mode = #tpu.pipeline_mode<synchronous>, transform_indices = @transform_7, window_bounds = array<i64: 1, 128>}, {pipeline_mode = #tpu.pipeline_mode<synchronous>, transform_indices = @transform_8, window_bounds = array<i64: 32, 128>}, {pipeline_mode = #tpu.pipeline_mode<synchronous>, transform_indices = @transform_9, window_bounds = array<i64: 1, 128>}, {transform_indices = @transform_10, window_bounds = array<i64: 8, 128>}, {pipeline_mode = #tpu.pipeline_mode<synchronous>, transform_indices = @transform_11, window_bounds = array<i64: 1, 32>}, {pipeline_mode = #tpu.pipeline_mode<synchronous>, transform_indices = @transform_12, window_bounds = array<i64: 1, 32>}]} {
    %c0_i32 = arith.constant 0 : i32
    %0 = arith.cmpi eq, %arg0, %c0_i32 : i32
    %1 = arith.extui %0 : i1 to i32
    %c0_i32_0 = arith.constant 0 : i32
    %2 = arith.cmpi ne, %1, %c0_i32_0 : i32
    scf.if %2 {
      %c0_83 = arith.constant 0 : index
      %c0_84 = arith.constant 0 : index
      %294 = vector.load %arg2[%c0_83, %c0_84] : memref<1x32xf32, #tpu.memory_space<vmem>>, vector<1x32xf32>
      %c0_85 = arith.constant 0 : index
      %c0_86 = arith.constant 0 : index
      %295 = vector.load %arg12[%c0_85, %c0_86] : memref<1x32xf32, #tpu.memory_space<vmem>>, vector<1x32xf32>
      tpu.vector_store %arg12[%c0_85, %c0_86], %294 {strides = array<i32>} : memref<1x32xf32, #tpu.memory_space<vmem>>, vector<1x32xf32>,
      %c0_87 = arith.constant 0 : index
      %c0_88 = arith.constant 0 : index
      %296 = vector.load %arg3[%c0_87, %c0_88] : memref<1x32xf32, #tpu.memory_space<vmem>>, vector<1x32xf32>
      %c0_89 = arith.constant 0 : index
      %c0_90 = arith.constant 0 : index
      %297 = vector.load %arg13[%c0_89, %c0_90] : memref<1x32xf32, #tpu.memory_space<vmem>>, vector<1x32xf32>
      tpu.vector_store %arg13[%c0_89, %c0_90], %296 {strides = array<i32>} : memref<1x32xf32, #tpu.memory_space<vmem>>, vector<1x32xf32>,
    } else {
    }
    %c0 = arith.constant 0 : index
    %c0_1 = arith.constant 0 : index
    %3 = vector.load %arg12[%c0, %c0_1] : memref<1x32xf32, #tpu.memory_space<vmem>>, vector<1x32xf32>
    %c0_2 = arith.constant 0 : index
    %c0_3 = arith.constant 0 : index
    %4 = vector.load %arg13[%c0_2, %c0_3] : memref<1x32xf32, #tpu.memory_space<vmem>>, vector<1x32xf32>
    %c0_4 = arith.constant 0 : index
    %c0_5 = arith.constant 0 : index
    %5 = vector.load %arg4[%c0_4, %c0_5] : memref<32x128xf32, #tpu.memory_space<vmem>>, vector<32x128xf32>
    %c0_6 = arith.constant 0 : index
    %c0_7 = arith.constant 0 : index
    %6 = vector.load %arg5[%c0_6, %c0_7] : memref<1x128xf32, #tpu.memory_space<vmem>>, vector<1x128xf32>
    %c0_8 = arith.constant 0 : index
    %c0_9 = arith.constant 0 : index
    %7 = vector.load %arg6[%c0_8, %c0_9] : memref<1x128xf32, #tpu.memory_space<vmem>>, vector<1x128xf32>
    %c0_10 = arith.constant 0 : index
    %c0_11 = arith.constant 0 : index
    %8 = vector.load %arg7[%c0_10, %c0_11] : memref<1x128xf32, #tpu.memory_space<vmem>>, vector<1x128xf32>
    %c0_12 = arith.constant 0 : index
    %c0_13 = arith.constant 0 : index
    %9 = vector.load %arg8[%c0_12, %c0_13] : memref<1x128xf32, #tpu.memory_space<vmem>>, vector<1x128xf32>
    %10 = tpu.iota {dimensions = array<i32: 1>} : vector<1x128xi32>
    %c96_i32 = arith.constant 96 : i32
    %11 = vector.broadcast %c96_i32 : i32 to vector<1x128xi32>
    %12 = arith.cmpi sge, %10, %11 : vector<1x128xi32>
    %c0_i32_14 = arith.constant 0 : i32
    %13 = arith.index_cast %c0_i32_14 : i32 to index
    %c0_15 = arith.constant 0 : index
    %14 = vector.load %arg1[%13, %c0_15] : memref<8x128xf32, #tpu.memory_space<vmem>>, vector<1x128xf32>
    %cst = arith.constant dense<0.000000e+00> : vector<1x128xf32>
    %15 = tpu.matmul %3, %5, %cst {dimension_numbers = #tpu.dot_dimension_numbers<[1], [0], [0], [1], [0, 0, 1, 1], [], []>} : vector<1x32xf32>, vector<32x128xf32>, vector<1x128xf32> -> vector<1x128xf32>
    %16 = arith.addf %15, %6 : vector<1x128xf32>
    %17 = arith.mulf %7, %14 : vector<1x128xf32>
    %18 = arith.mulf %17, %16 : vector<1x128xf32>
    %19 = arith.mulf %8, %14 : vector<1x128xf32>
    %20 = arith.addf %18, %19 : vector<1x128xf32>
    %21 = arith.mulf %9, %16 : vector<1x128xf32>
    %22 = arith.addf %20, %21 : vector<1x128xf32>
    %cst_16 = arith.constant 2.000000e+00 : f32
    %23 = vector.broadcast %cst_16 : f32 to vector<1x128xf32>
    %24 = arith.mulf %23, %22 : vector<1x128xf32>
    %25 = arith.select %12, %24, %22 : vector<1x128xi1>, vector<1x128xf32>
    %26 = arith.negf %25 : vector<1x128xf32>
    %27 = math.exp %26 : vector<1x128xf32>
    %cst_17 = arith.constant 1.000000e+00 : f32
    %28 = vector.broadcast %cst_17 : f32 to vector<1x128xf32>
    %29 = arith.addf %28, %27 : vector<1x128xf32>
    %30 = arith.divf %28, %29 : vector<1x128xf32>
    %cst_18 = arith.constant 2.000000e+00 : f32
    %31 = vector.broadcast %cst_18 : f32 to vector<1x128xf32>
    %32 = arith.mulf %31, %30 : vector<1x128xf32>
    %cst_19 = arith.constant 1.000000e+00 : f32
    %33 = vector.broadcast %cst_19 : f32 to vector<1x128xf32>
    %34 = arith.subf %32, %33 : vector<1x128xf32>
    %35 = arith.select %12, %34, %30 : vector<1x128xi1>, vector<1x128xf32>
    %36 = vector.extract_strided_slice %35 {offsets = [0, 0], sizes = [1, 32], strides = [1, 1]} : vector<1x128xf32> to vector<1x32xf32>
    %37 = vector.extract_strided_slice %35 {offsets = [0, 32], sizes = [1, 32], strides = [1, 1]} : vector<1x128xf32> to vector<1x32xf32>
    %38 = vector.extract_strided_slice %35 {offsets = [0, 64], sizes = [1, 32], strides = [1, 1]} : vector<1x128xf32> to vector<1x32xf32>
    %39 = vector.extract_strided_slice %35 {offsets = [0, 96], sizes = [1, 32], strides = [1, 1]} : vector<1x128xf32> to vector<1x32xf32>
    %40 = arith.mulf %36, %4 : vector<1x32xf32>
    %41 = arith.mulf %37, %39 : vector<1x32xf32>
    %42 = arith.addf %40, %41 : vector<1x32xf32>
    %43 = math.tanh %42 : vector<1x32xf32>
    %44 = arith.mulf %38, %43 : vector<1x32xf32>
    %45 = arith.index_cast %c0_i32_14 : i32 to index
    %c0_20 = arith.constant 0 : index
    %46 = vector.load %arg14[%45, %c0_20] : memref<8x32xf32, #tpu.memory_space<vmem>>, vector<1x32xf32>
    tpu.vector_store %arg14[%45, %c0_20], %44 {strides = array<i32>} : memref<8x32xf32, #tpu.memory_space<vmem>>, vector<1x32xf32>,
    %c1_i32 = arith.constant 1 : i32
    %47 = arith.index_cast %c1_i32 : i32 to index
    %c0_21 = arith.constant 0 : index
    %48 = vector.load %arg1[%47, %c0_21] : memref<8x128xf32, #tpu.memory_space<vmem>>, vector<1x128xf32>
    %cst_22 = arith.constant dense<0.000000e+00> : vector<1x128xf32>
    %49 = tpu.matmul %44, %5, %cst_22 {dimension_numbers = #tpu.dot_dimension_numbers<[1], [0], [0], [1], [0, 0, 1, 1], [], []>} : vector<1x32xf32>, vector<32x128xf32>, vector<1x128xf32> -> vector<1x128xf32>
    %50 = arith.addf %49, %6 : vector<1x128xf32>
    %51 = arith.mulf %7, %48 : vector<1x128xf32>
    %52 = arith.mulf %51, %50 : vector<1x128xf32>
    %53 = arith.mulf %8, %48 : vector<1x128xf32>
    %54 = arith.addf %52, %53 : vector<1x128xf32>
    %55 = arith.mulf %9, %50 : vector<1x128xf32>
    %56 = arith.addf %54, %55 : vector<1x128xf32>
    %cst_23 = arith.constant 2.000000e+00 : f32
    %57 = vector.broadcast %cst_23 : f32 to vector<1x128xf32>
    %58 = arith.mulf %57, %56 : vector<1x128xf32>
    %59 = arith.select %12, %58, %56 : vector<1x128xi1>, vector<1x128xf32>
    %60 = arith.negf %59 : vector<1x128xf32>
    %61 = math.exp %60 : vector<1x128xf32>
    %cst_24 = arith.constant 1.000000e+00 : f32
    %62 = vector.broadcast %cst_24 : f32 to vector<1x128xf32>
    %63 = arith.addf %62, %61 : vector<1x128xf32>
    %64 = arith.divf %62, %63 : vector<1x128xf32>
    %cst_25 = arith.constant 2.000000e+00 : f32
    %65 = vector.broadcast %cst_25 : f32 to vector<1x128xf32>
    %66 = arith.mulf %65, %64 : vector<1x128xf32>
    %cst_26 = arith.constant 1.000000e+00 : f32
    %67 = vector.broadcast %cst_26 : f32 to vector<1x128xf32>
    %68 = arith.subf %66, %67 : vector<1x128xf32>
    %69 = arith.select %12, %68, %64 : vector<1x128xi1>, vector<1x128xf32>
    %70 = vector.extract_strided_slice %69 {offsets = [0, 0], sizes = [1, 32], strides = [1, 1]} : vector<1x128xf32> to vector<1x32xf32>
    %71 = vector.extract_strided_slice %69 {offsets = [0, 32], sizes = [1, 32], strides = [1, 1]} : vector<1x128xf32> to vector<1x32xf32>
    %72 = vector.extract_strided_slice %69 {offsets = [0, 64], sizes = [1, 32], strides = [1, 1]} : vector<1x128xf32> to vector<1x32xf32>
    %73 = vector.extract_strided_slice %69 {offsets = [0, 96], sizes = [1, 32], strides = [1, 1]} : vector<1x128xf32> to vector<1x32xf32>
    %74 = arith.mulf %70, %42 : vector<1x32xf32>
    %75 = arith.mulf %71, %73 : vector<1x32xf32>
    %76 = arith.addf %74, %75 : vector<1x32xf32>
    %77 = math.tanh %76 : vector<1x32xf32>
    %78 = arith.mulf %72, %77 : vector<1x32xf32>
    %79 = arith.index_cast %c1_i32 : i32 to index
    %c0_27 = arith.constant 0 : index
    %80 = vector.load %arg14[%79, %c0_27] : memref<8x32xf32, #tpu.memory_space<vmem>>, vector<1x32xf32>
    tpu.vector_store %arg14[%79, %c0_27], %78 {strides = array<i32>} : memref<8x32xf32, #tpu.memory_space<vmem>>, vector<1x32xf32>,
    %c2_i32 = arith.constant 2 : i32
    %81 = arith.index_cast %c2_i32 : i32 to index
    %c0_28 = arith.constant 0 : index
    %82 = vector.load %arg1[%81, %c0_28] : memref<8x128xf32, #tpu.memory_space<vmem>>, vector<1x128xf32>
    %cst_29 = arith.constant dense<0.000000e+00> : vector<1x128xf32>
    %83 = tpu.matmul %78, %5, %cst_29 {dimension_numbers = #tpu.dot_dimension_numbers<[1], [0], [0], [1], [0, 0, 1, 1], [], []>} : vector<1x32xf32>, vector<32x128xf32>, vector<1x128xf32> -> vector<1x128xf32>
    %84 = arith.addf %83, %6 : vector<1x128xf32>
    %85 = arith.mulf %7, %82 : vector<1x128xf32>
    %86 = arith.mulf %85, %84 : vector<1x128xf32>
    %87 = arith.mulf %8, %82 : vector<1x128xf32>
    %88 = arith.addf %86, %87 : vector<1x128xf32>
    %89 = arith.mulf %9, %84 : vector<1x128xf32>
    %90 = arith.addf %88, %89 : vector<1x128xf32>
    %cst_30 = arith.constant 2.000000e+00 : f32
    %91 = vector.broadcast %cst_30 : f32 to vector<1x128xf32>
    %92 = arith.mulf %91, %90 : vector<1x128xf32>
    %93 = arith.select %12, %92, %90 : vector<1x128xi1>, vector<1x128xf32>
    %94 = arith.negf %93 : vector<1x128xf32>
    %95 = math.exp %94 : vector<1x128xf32>
    %cst_31 = arith.constant 1.000000e+00 : f32
    %96 = vector.broadcast %cst_31 : f32 to vector<1x128xf32>
    %97 = arith.addf %96, %95 : vector<1x128xf32>
    %98 = arith.divf %96, %97 : vector<1x128xf32>
    %cst_32 = arith.constant 2.000000e+00 : f32
    %99 = vector.broadcast %cst_32 : f32 to vector<1x128xf32>
    %100 = arith.mulf %99, %98 : vector<1x128xf32>
    %cst_33 = arith.constant 1.000000e+00 : f32
    %101 = vector.broadcast %cst_33 : f32 to vector<1x128xf32>
    %102 = arith.subf %100, %101 : vector<1x128xf32>
    %103 = arith.select %12, %102, %98 : vector<1x128xi1>, vector<1x128xf32>
    %104 = vector.extract_strided_slice %103 {offsets = [0, 0], sizes = [1, 32], strides = [1, 1]} : vector<1x128xf32> to vector<1x32xf32>
    %105 = vector.extract_strided_slice %103 {offsets = [0, 32], sizes = [1, 32], strides = [1, 1]} : vector<1x128xf32> to vector<1x32xf32>
    %106 = vector.extract_strided_slice %103 {offsets = [0, 64], sizes = [1, 32], strides = [1, 1]} : vector<1x128xf32> to vector<1x32xf32>
    %107 = vector.extract_strided_slice %103 {offsets = [0, 96], sizes = [1, 32], strides = [1, 1]} : vector<1x128xf32> to vector<1x32xf32>
    %108 = arith.mulf %104, %76 : vector<1x32xf32>
    %109 = arith.mulf %105, %107 : vector<1x32xf32>
    %110 = arith.addf %108, %109 : vector<1x32xf32>
    %111 = math.tanh %110 : vector<1x32xf32>
    %112 = arith.mulf %106, %111 : vector<1x32xf32>
    %113 = arith.index_cast %c2_i32 : i32 to index
    %c0_34 = arith.constant 0 : index
    %114 = vector.load %arg14[%113, %c0_34] : memref<8x32xf32, #tpu.memory_space<vmem>>, vector<1x32xf32>
    tpu.vector_store %arg14[%113, %c0_34], %112 {strides = array<i32>} : memref<8x32xf32, #tpu.memory_space<vmem>>, vector<1x32xf32>,
    %c3_i32 = arith.constant 3 : i32
    %115 = arith.index_cast %c3_i32 : i32 to index
    %c0_35 = arith.constant 0 : index
    %116 = vector.load %arg1[%115, %c0_35] : memref<8x128xf32, #tpu.memory_space<vmem>>, vector<1x128xf32>
    %cst_36 = arith.constant dense<0.000000e+00> : vector<1x128xf32>
    %117 = tpu.matmul %112, %5, %cst_36 {dimension_numbers = #tpu.dot_dimension_numbers<[1], [0], [0], [1], [0, 0, 1, 1], [], []>} : vector<1x32xf32>, vector<32x128xf32>, vector<1x128xf32> -> vector<1x128xf32>
    %118 = arith.addf %117, %6 : vector<1x128xf32>
    %119 = arith.mulf %7, %116 : vector<1x128xf32>
    %120 = arith.mulf %119, %118 : vector<1x128xf32>
    %121 = arith.mulf %8, %116 : vector<1x128xf32>
    %122 = arith.addf %120, %121 : vector<1x128xf32>
    %123 = arith.mulf %9, %118 : vector<1x128xf32>
    %124 = arith.addf %122, %123 : vector<1x128xf32>
    %cst_37 = arith.constant 2.000000e+00 : f32
    %125 = vector.broadcast %cst_37 : f32 to vector<1x128xf32>
    %126 = arith.mulf %125, %124 : vector<1x128xf32>
    %127 = arith.select %12, %126, %124 : vector<1x128xi1>, vector<1x128xf32>
    %128 = arith.negf %127 : vector<1x128xf32>
    %129 = math.exp %128 : vector<1x128xf32>
    %cst_38 = arith.constant 1.000000e+00 : f32
    %130 = vector.broadcast %cst_38 : f32 to vector<1x128xf32>
    %131 = arith.addf %130, %129 : vector<1x128xf32>
    %132 = arith.divf %130, %131 : vector<1x128xf32>
    %cst_39 = arith.constant 2.000000e+00 : f32
    %133 = vector.broadcast %cst_39 : f32 to vector<1x128xf32>
    %134 = arith.mulf %133, %132 : vector<1x128xf32>
    %cst_40 = arith.constant 1.000000e+00 : f32
    %135 = vector.broadcast %cst_40 : f32 to vector<1x128xf32>
    %136 = arith.subf %134, %135 : vector<1x128xf32>
    %137 = arith.select %12, %136, %132 : vector<1x128xi1>, vector<1x128xf32>
    %138 = vector.extract_strided_slice %137 {offsets = [0, 0], sizes = [1, 32], strides = [1, 1]} : vector<1x128xf32> to vector<1x32xf32>
    %139 = vector.extract_strided_slice %137 {offsets = [0, 32], sizes = [1, 32], strides = [1, 1]} : vector<1x128xf32> to vector<1x32xf32>
    %140 = vector.extract_strided_slice %137 {offsets = [0, 64], sizes = [1, 32], strides = [1, 1]} : vector<1x128xf32> to vector<1x32xf32>
    %141 = vector.extract_strided_slice %137 {offsets = [0, 96], sizes = [1, 32], strides = [1, 1]} : vector<1x128xf32> to vector<1x32xf32>
    %142 = arith.mulf %138, %110 : vector<1x32xf32>
    %143 = arith.mulf %139, %141 : vector<1x32xf32>
    %144 = arith.addf %142, %143 : vector<1x32xf32>
    %145 = math.tanh %144 : vector<1x32xf32>
    %146 = arith.mulf %140, %145 : vector<1x32xf32>
    %147 = arith.index_cast %c3_i32 : i32 to index
    %c0_41 = arith.constant 0 : index
    %148 = vector.load %arg14[%147, %c0_41] : memref<8x32xf32, #tpu.memory_space<vmem>>, vector<1x32xf32>
    tpu.vector_store %arg14[%147, %c0_41], %146 {strides = array<i32>} : memref<8x32xf32, #tpu.memory_space<vmem>>, vector<1x32xf32>,
    %c4_i32 = arith.constant 4 : i32
    %149 = arith.index_cast %c4_i32 : i32 to index
    %c0_42 = arith.constant 0 : index
    %150 = vector.load %arg1[%149, %c0_42] : memref<8x128xf32, #tpu.memory_space<vmem>>, vector<1x128xf32>
    %cst_43 = arith.constant dense<0.000000e+00> : vector<1x128xf32>
    %151 = tpu.matmul %146, %5, %cst_43 {dimension_numbers = #tpu.dot_dimension_numbers<[1], [0], [0], [1], [0, 0, 1, 1], [], []>} : vector<1x32xf32>, vector<32x128xf32>, vector<1x128xf32> -> vector<1x128xf32>
    %152 = arith.addf %151, %6 : vector<1x128xf32>
    %153 = arith.mulf %7, %150 : vector<1x128xf32>
    %154 = arith.mulf %153, %152 : vector<1x128xf32>
    %155 = arith.mulf %8, %150 : vector<1x128xf32>
    %156 = arith.addf %154, %155 : vector<1x128xf32>
    %157 = arith.mulf %9, %152 : vector<1x128xf32>
    %158 = arith.addf %156, %157 : vector<1x128xf32>
    %cst_44 = arith.constant 2.000000e+00 : f32
    %159 = vector.broadcast %cst_44 : f32 to vector<1x128xf32>
    %160 = arith.mulf %159, %158 : vector<1x128xf32>
    %161 = arith.select %12, %160, %158 : vector<1x128xi1>, vector<1x128xf32>
    %162 = arith.negf %161 : vector<1x128xf32>
    %163 = math.exp %162 : vector<1x128xf32>
    %cst_45 = arith.constant 1.000000e+00 : f32
    %164 = vector.broadcast %cst_45 : f32 to vector<1x128xf32>
    %165 = arith.addf %164, %163 : vector<1x128xf32>
    %166 = arith.divf %164, %165 : vector<1x128xf32>
    %cst_46 = arith.constant 2.000000e+00 : f32
    %167 = vector.broadcast %cst_46 : f32 to vector<1x128xf32>
    %168 = arith.mulf %167, %166 : vector<1x128xf32>
    %cst_47 = arith.constant 1.000000e+00 : f32
    %169 = vector.broadcast %cst_47 : f32 to vector<1x128xf32>
    %170 = arith.subf %168, %169 : vector<1x128xf32>
    %171 = arith.select %12, %170, %166 : vector<1x128xi1>, vector<1x128xf32>
    %172 = vector.extract_strided_slice %171 {offsets = [0, 0], sizes = [1, 32], strides = [1, 1]} : vector<1x128xf32> to vector<1x32xf32>
    %173 = vector.extract_strided_slice %171 {offsets = [0, 32], sizes = [1, 32], strides = [1, 1]} : vector<1x128xf32> to vector<1x32xf32>
    %174 = vector.extract_strided_slice %171 {offsets = [0, 64], sizes = [1, 32], strides = [1, 1]} : vector<1x128xf32> to vector<1x32xf32>
    %175 = vector.extract_strided_slice %171 {offsets = [0, 96], sizes = [1, 32], strides = [1, 1]} : vector<1x128xf32> to vector<1x32xf32>
    %176 = arith.mulf %172, %144 : vector<1x32xf32>
    %177 = arith.mulf %173, %175 : vector<1x32xf32>
    %178 = arith.addf %176, %177 : vector<1x32xf32>
    %179 = math.tanh %178 : vector<1x32xf32>
    %180 = arith.mulf %174, %179 : vector<1x32xf32>
    %181 = arith.index_cast %c4_i32 : i32 to index
    %c0_48 = arith.constant 0 : index
    %182 = vector.load %arg14[%181, %c0_48] : memref<8x32xf32, #tpu.memory_space<vmem>>, vector<1x32xf32>
    tpu.vector_store %arg14[%181, %c0_48], %180 {strides = array<i32>} : memref<8x32xf32, #tpu.memory_space<vmem>>, vector<1x32xf32>,
    %c5_i32 = arith.constant 5 : i32
    %183 = arith.index_cast %c5_i32 : i32 to index
    %c0_49 = arith.constant 0 : index
    %184 = vector.load %arg1[%183, %c0_49] : memref<8x128xf32, #tpu.memory_space<vmem>>, vector<1x128xf32>
    %cst_50 = arith.constant dense<0.000000e+00> : vector<1x128xf32>
    %185 = tpu.matmul %180, %5, %cst_50 {dimension_numbers = #tpu.dot_dimension_numbers<[1], [0], [0], [1], [0, 0, 1, 1], [], []>} : vector<1x32xf32>, vector<32x128xf32>, vector<1x128xf32> -> vector<1x128xf32>
    %186 = arith.addf %185, %6 : vector<1x128xf32>
    %187 = arith.mulf %7, %184 : vector<1x128xf32>
    %188 = arith.mulf %187, %186 : vector<1x128xf32>
    %189 = arith.mulf %8, %184 : vector<1x128xf32>
    %190 = arith.addf %188, %189 : vector<1x128xf32>
    %191 = arith.mulf %9, %186 : vector<1x128xf32>
    %192 = arith.addf %190, %191 : vector<1x128xf32>
    %cst_51 = arith.constant 2.000000e+00 : f32
    %193 = vector.broadcast %cst_51 : f32 to vector<1x128xf32>
    %194 = arith.mulf %193, %192 : vector<1x128xf32>
    %195 = arith.select %12, %194, %192 : vector<1x128xi1>, vector<1x128xf32>
    %196 = arith.negf %195 : vector<1x128xf32>
    %197 = math.exp %196 : vector<1x128xf32>
    %cst_52 = arith.constant 1.000000e+00 : f32
    %198 = vector.broadcast %cst_52 : f32 to vector<1x128xf32>
    %199 = arith.addf %198, %197 : vector<1x128xf32>
    %200 = arith.divf %198, %199 : vector<1x128xf32>
    %cst_53 = arith.constant 2.000000e+00 : f32
    %201 = vector.broadcast %cst_53 : f32 to vector<1x128xf32>
    %202 = arith.mulf %201, %200 : vector<1x128xf32>
    %cst_54 = arith.constant 1.000000e+00 : f32
    %203 = vector.broadcast %cst_54 : f32 to vector<1x128xf32>
    %204 = arith.subf %202, %203 : vector<1x128xf32>
    %205 = arith.select %12, %204, %200 : vector<1x128xi1>, vector<1x128xf32>
    %206 = vector.extract_strided_slice %205 {offsets = [0, 0], sizes = [1, 32], strides = [1, 1]} : vector<1x128xf32> to vector<1x32xf32>
    %207 = vector.extract_strided_slice %205 {offsets = [0, 32], sizes = [1, 32], strides = [1, 1]} : vector<1x128xf32> to vector<1x32xf32>
    %208 = vector.extract_strided_slice %205 {offsets = [0, 64], sizes = [1, 32], strides = [1, 1]} : vector<1x128xf32> to vector<1x32xf32>
    %209 = vector.extract_strided_slice %205 {offsets = [0, 96], sizes = [1, 32], strides = [1, 1]} : vector<1x128xf32> to vector<1x32xf32>
    %210 = arith.mulf %206, %178 : vector<1x32xf32>
    %211 = arith.mulf %207, %209 : vector<1x32xf32>
    %212 = arith.addf %210, %211 : vector<1x32xf32>
    %213 = math.tanh %212 : vector<1x32xf32>
    %214 = arith.mulf %208, %213 : vector<1x32xf32>
    %215 = arith.index_cast %c5_i32 : i32 to index
    %c0_55 = arith.constant 0 : index
    %216 = vector.load %arg14[%215, %c0_55] : memref<8x32xf32, #tpu.memory_space<vmem>>, vector<1x32xf32>
    tpu.vector_store %arg14[%215, %c0_55], %214 {strides = array<i32>} : memref<8x32xf32, #tpu.memory_space<vmem>>, vector<1x32xf32>,
    %c6_i32 = arith.constant 6 : i32
    %217 = arith.index_cast %c6_i32 : i32 to index
    %c0_56 = arith.constant 0 : index
    %218 = vector.load %arg1[%217, %c0_56] : memref<8x128xf32, #tpu.memory_space<vmem>>, vector<1x128xf32>
    %cst_57 = arith.constant dense<0.000000e+00> : vector<1x128xf32>
    %219 = tpu.matmul %214, %5, %cst_57 {dimension_numbers = #tpu.dot_dimension_numbers<[1], [0], [0], [1], [0, 0, 1, 1], [], []>} : vector<1x32xf32>, vector<32x128xf32>, vector<1x128xf32> -> vector<1x128xf32>
    %220 = arith.addf %219, %6 : vector<1x128xf32>
    %221 = arith.mulf %7, %218 : vector<1x128xf32>
    %222 = arith.mulf %221, %220 : vector<1x128xf32>
    %223 = arith.mulf %8, %218 : vector<1x128xf32>
    %224 = arith.addf %222, %223 : vector<1x128xf32>
    %225 = arith.mulf %9, %220 : vector<1x128xf32>
    %226 = arith.addf %224, %225 : vector<1x128xf32>
    %cst_58 = arith.constant 2.000000e+00 : f32
    %227 = vector.broadcast %cst_58 : f32 to vector<1x128xf32>
    %228 = arith.mulf %227, %226 : vector<1x128xf32>
    %229 = arith.select %12, %228, %226 : vector<1x128xi1>, vector<1x128xf32>
    %230 = arith.negf %229 : vector<1x128xf32>
    %231 = math.exp %230 : vector<1x128xf32>
    %cst_59 = arith.constant 1.000000e+00 : f32
    %232 = vector.broadcast %cst_59 : f32 to vector<1x128xf32>
    %233 = arith.addf %232, %231 : vector<1x128xf32>
    %234 = arith.divf %232, %233 : vector<1x128xf32>
    %cst_60 = arith.constant 2.000000e+00 : f32
    %235 = vector.broadcast %cst_60 : f32 to vector<1x128xf32>
    %236 = arith.mulf %235, %234 : vector<1x128xf32>
    %cst_61 = arith.constant 1.000000e+00 : f32
    %237 = vector.broadcast %cst_61 : f32 to vector<1x128xf32>
    %238 = arith.subf %236, %237 : vector<1x128xf32>
    %239 = arith.select %12, %238, %234 : vector<1x128xi1>, vector<1x128xf32>
    %240 = vector.extract_strided_slice %239 {offsets = [0, 0], sizes = [1, 32], strides = [1, 1]} : vector<1x128xf32> to vector<1x32xf32>
    %241 = vector.extract_strided_slice %239 {offsets = [0, 32], sizes = [1, 32], strides = [1, 1]} : vector<1x128xf32> to vector<1x32xf32>
    %242 = vector.extract_strided_slice %239 {offsets = [0, 64], sizes = [1, 32], strides = [1, 1]} : vector<1x128xf32> to vector<1x32xf32>
    %243 = vector.extract_strided_slice %239 {offsets = [0, 96], sizes = [1, 32], strides = [1, 1]} : vector<1x128xf32> to vector<1x32xf32>
    %244 = arith.mulf %240, %212 : vector<1x32xf32>
    %245 = arith.mulf %241, %243 : vector<1x32xf32>
    %246 = arith.addf %244, %245 : vector<1x32xf32>
    %247 = math.tanh %246 : vector<1x32xf32>
    %248 = arith.mulf %242, %247 : vector<1x32xf32>
    %249 = arith.index_cast %c6_i32 : i32 to index
    %c0_62 = arith.constant 0 : index
    %250 = vector.load %arg14[%249, %c0_62] : memref<8x32xf32, #tpu.memory_space<vmem>>, vector<1x32xf32>
    tpu.vector_store %arg14[%249, %c0_62], %248 {strides = array<i32>} : memref<8x32xf32, #tpu.memory_space<vmem>>, vector<1x32xf32>,
    %c7_i32 = arith.constant 7 : i32
    %251 = arith.index_cast %c7_i32 : i32 to index
    %c0_63 = arith.constant 0 : index
    %252 = vector.load %arg1[%251, %c0_63] : memref<8x128xf32, #tpu.memory_space<vmem>>, vector<1x128xf32>
    %cst_64 = arith.constant dense<0.000000e+00> : vector<1x128xf32>
    %253 = tpu.matmul %248, %5, %cst_64 {dimension_numbers = #tpu.dot_dimension_numbers<[1], [0], [0], [1], [0, 0, 1, 1], [], []>} : vector<1x32xf32>, vector<32x128xf32>, vector<1x128xf32> -> vector<1x128xf32>
    %254 = arith.addf %253, %6 : vector<1x128xf32>
    %255 = arith.mulf %7, %252 : vector<1x128xf32>
    %256 = arith.mulf %255, %254 : vector<1x128xf32>
    %257 = arith.mulf %8, %252 : vector<1x128xf32>
    %258 = arith.addf %256, %257 : vector<1x128xf32>
    %259 = arith.mulf %9, %254 : vector<1x128xf32>
    %260 = arith.addf %258, %259 : vector<1x128xf32>
    %cst_65 = arith.constant 2.000000e+00 : f32
    %261 = vector.broadcast %cst_65 : f32 to vector<1x128xf32>
    %262 = arith.mulf %261, %260 : vector<1x128xf32>
    %263 = arith.select %12, %262, %260 : vector<1x128xi1>, vector<1x128xf32>
    %264 = arith.negf %263 : vector<1x128xf32>
    %265 = math.exp %264 : vector<1x128xf32>
    %cst_66 = arith.constant 1.000000e+00 : f32
    %266 = vector.broadcast %cst_66 : f32 to vector<1x128xf32>
    %267 = arith.addf %266, %265 : vector<1x128xf32>
    %268 = arith.divf %266, %267 : vector<1x128xf32>
    %cst_67 = arith.constant 2.000000e+00 : f32
    %269 = vector.broadcast %cst_67 : f32 to vector<1x128xf32>
    %270 = arith.mulf %269, %268 : vector<1x128xf32>
    %cst_68 = arith.constant 1.000000e+00 : f32
    %271 = vector.broadcast %cst_68 : f32 to vector<1x128xf32>
    %272 = arith.subf %270, %271 : vector<1x128xf32>
    %273 = arith.select %12, %272, %268 : vector<1x128xi1>, vector<1x128xf32>
    %274 = vector.extract_strided_slice %273 {offsets = [0, 0], sizes = [1, 32], strides = [1, 1]} : vector<1x128xf32> to vector<1x32xf32>
    %275 = vector.extract_strided_slice %273 {offsets = [0, 32], sizes = [1, 32], strides = [1, 1]} : vector<1x128xf32> to vector<1x32xf32>
    %276 = vector.extract_strided_slice %273 {offsets = [0, 64], sizes = [1, 32], strides = [1, 1]} : vector<1x128xf32> to vector<1x32xf32>
    %277 = vector.extract_strided_slice %273 {offsets = [0, 96], sizes = [1, 32], strides = [1, 1]} : vector<1x128xf32> to vector<1x32xf32>
    %278 = arith.mulf %274, %246 : vector<1x32xf32>
    %279 = arith.mulf %275, %277 : vector<1x32xf32>
    %280 = arith.addf %278, %279 : vector<1x32xf32>
    %281 = math.tanh %280 : vector<1x32xf32>
    %282 = arith.mulf %276, %281 : vector<1x32xf32>
    %283 = arith.index_cast %c7_i32 : i32 to index
    %c0_69 = arith.constant 0 : index
    %284 = vector.load %arg14[%283, %c0_69] : memref<8x32xf32, #tpu.memory_space<vmem>>, vector<1x32xf32>
    tpu.vector_store %arg14[%283, %c0_69], %282 {strides = array<i32>} : memref<8x32xf32, #tpu.memory_space<vmem>>, vector<1x32xf32>,
    %c8_i32 = arith.constant 8 : i32
    %c0_70 = arith.constant 0 : index
    %c0_71 = arith.constant 0 : index
    %285 = vector.load %arg12[%c0_70, %c0_71] : memref<1x32xf32, #tpu.memory_space<vmem>>, vector<1x32xf32>
    tpu.vector_store %arg12[%c0_70, %c0_71], %282 {strides = array<i32>} : memref<1x32xf32, #tpu.memory_space<vmem>>, vector<1x32xf32>,
    %c0_72 = arith.constant 0 : index
    %c0_73 = arith.constant 0 : index
    %286 = vector.load %arg13[%c0_72, %c0_73] : memref<1x32xf32, #tpu.memory_space<vmem>>, vector<1x32xf32>
    tpu.vector_store %arg13[%c0_72, %c0_73], %280 {strides = array<i32>} : memref<1x32xf32, #tpu.memory_space<vmem>>, vector<1x32xf32>,
    %c0_74 = arith.constant 0 : index
    %c0_75 = arith.constant 0 : index
    %287 = vector.load %arg14[%c0_74, %c0_75] : memref<8x32xf32, #tpu.memory_space<vmem>>, vector<8x32xf32>
    %c0_76 = arith.constant 0 : index
    %c0_77 = arith.constant 0 : index
    %288 = vector.load %arg9[%c0_76, %c0_77] : memref<32x128xf32, #tpu.memory_space<vmem>>, vector<32x128xf32>
    %cst_78 = arith.constant dense<0.000000e+00> : vector<8x128xf32>
    %289 = tpu.matmul %287, %288, %cst_78 {dimension_numbers = #tpu.dot_dimension_numbers<[1], [0], [0], [1], [0, 0, 1, 1], [], []>} : vector<8x32xf32>, vector<32x128xf32>, vector<8x128xf32> -> vector<8x128xf32>
    %c0_79 = arith.constant 0 : index
    %c0_80 = arith.constant 0 : index
    %290 = vector.load %arg10[%c0_79, %c0_80] : memref<1x128xf32, #tpu.memory_space<vmem>>, vector<1x128xf32>
    %291 = vector.broadcast %290 : vector<1x128xf32> to vector<8x128xf32>
    %292 = arith.addf %289, %291 : vector<8x128xf32>
    %c0_81 = arith.constant 0 : index
    %c0_82 = arith.constant 0 : index
    %293 = vector.load %arg11[%c0_81, %c0_82] : memref<8x128xf32, #tpu.memory_space<vmem>>, vector<8x128xf32>
    tpu.vector_store %arg11[%c0_81, %c0_82], %292 {strides = array<i32>} : memref<8x128xf32, #tpu.memory_space<vmem>>, vector<8x128xf32>,
    return
  }
  func.func @transform_0(%arg0: i32) -> (i32, i32) {
    %c0_i32 = arith.constant 0 : i32
    %c0_i32_0 = arith.constant 0 : i32
    return %arg0, %c0_i32 : i32, i32
  }
  func.func @transform_1(%arg0: i32) -> (i32, i32) {
    %c0_i32 = arith.constant 0 : i32
    %c0_i32_0 = arith.constant 0 : i32
    %c0_i32_1 = arith.constant 0 : i32
    return %c0_i32, %c0_i32_0 : i32, i32
  }
  func.func @transform_2(%arg0: i32) -> (i32, i32) {
    %c0_i32 = arith.constant 0 : i32
    %c0_i32_0 = arith.constant 0 : i32
    %c0_i32_1 = arith.constant 0 : i32
    return %c0_i32, %c0_i32_0 : i32, i32
  }
  func.func @transform_3(%arg0: i32) -> (i32, i32) {
    %c0_i32 = arith.constant 0 : i32
    %c0_i32_0 = arith.constant 0 : i32
    %c0_i32_1 = arith.constant 0 : i32
    return %c0_i32, %c0_i32_0 : i32, i32
  }
  func.func @transform_4(%arg0: i32) -> (i32, i32) {
    %c0_i32 = arith.constant 0 : i32
    %c0_i32_0 = arith.constant 0 : i32
    %c0_i32_1 = arith.constant 0 : i32
    return %c0_i32, %c0_i32_0 : i32, i32
  }
  func.func @transform_5(%arg0: i32) -> (i32, i32) {
    %c0_i32 = arith.constant 0 : i32
    %c0_i32_0 = arith.constant 0 : i32
    %c0_i32_1 = arith.constant 0 : i32
    return %c0_i32, %c0_i32_0 : i32, i32
  }
  func.func @transform_6(%arg0: i32) -> (i32, i32) {
    %c0_i32 = arith.constant 0 : i32
    %c0_i32_0 = arith.constant 0 : i32
    %c0_i32_1 = arith.constant 0 : i32
    return %c0_i32, %c0_i32_0 : i32, i32
  }
  func.func @transform_7(%arg0: i32) -> (i32, i32) {
    %c0_i32 = arith.constant 0 : i32
    %c0_i32_0 = arith.constant 0 : i32
    %c0_i32_1 = arith.constant 0 : i32
    return %c0_i32, %c0_i32_0 : i32, i32
  }
  func.func @transform_8(%arg0: i32) -> (i32, i32) {
    %c0_i32 = arith.constant 0 : i32
    %c0_i32_0 = arith.constant 0 : i32
    %c0_i32_1 = arith.constant 0 : i32
    return %c0_i32, %c0_i32_0 : i32, i32
  }
  func.func @transform_9(%arg0: i32) -> (i32, i32) {
    %c0_i32 = arith.constant 0 : i32
    %c0_i32_0 = arith.constant 0 : i32
    %c0_i32_1 = arith.constant 0 : i32
    return %c0_i32, %c0_i32_0 : i32, i32
  }
  func.func @transform_10(%arg0: i32) -> (i32, i32) {
    %c0_i32 = arith.constant 0 : i32
    %c0_i32_0 = arith.constant 0 : i32
    return %arg0, %c0_i32 : i32, i32
  }
  func.func @transform_11(%arg0: i32) -> (i32, i32) {
    %c0_i32 = arith.constant 0 : i32
    %c0_i32_0 = arith.constant 0 : i32
    %c0_i32_1 = arith.constant 0 : i32
    return %c0_i32, %c0_i32_0 : i32, i32
  }
  func.func @transform_12(%arg0: i32) -> (i32, i32) {
    %c0_i32 = arith.constant 0 : i32
    %c0_i32_0 = arith.constant 0 : i32
    %c0_i32_1 = arith.constant 0 : i32
    return %c0_i32, %c0_i32_0 : i32, i32
  }
}

</mosaic_0001>

<llo_original>
// kernel: tpu_custom_call.1
$region0: #{tpu_custom_call.1}
  #allocation0 [shape = 'u32[]', space=smem, size = 0x4, offset = 0x4, fixed_abs, tag = 'smem constant byte address 0x4 - core index']
  #allocation1 [shape = 'u32[72,128]{1,0:T(1,128)}', space=vmem, size = 0x9000, scoped, tag = 'internal scratch']
  #allocation2 [shape = 'f32[8,32]{1,0:T(8,128)}', space=vmem, size = 0x1000, scoped, tag = 'scratch operand']
  %s0 = inlined_call_operand.hbm [shape: f32[8,128], index: 0, kind: input, shape index: {}]
  %s1 = inlined_call_operand.hbm [shape: f32[1,32], index: 1, kind: input, shape index: {}]
  %s2 = inlined_call_operand.vmem [shape: f32[1,32], index: 2, kind: input, shape index: {}]
  %s3 = inlined_call_operand.hbm [shape: f32[32,128], index: 3, kind: input, shape index: {}]
  %s4 = inlined_call_operand.vmem [shape: f32[1,128], index: 4, kind: input, shape index: {}]
  %s5 = inlined_call_operand.vmem [shape: f32[1,128], index: 5, kind: input, shape index: {}]
  %s6 = inlined_call_operand.vmem [shape: f32[1,128], index: 6, kind: input, shape index: {}]
  %s7 = inlined_call_operand.vmem [shape: f32[1,128], index: 7, kind: input, shape index: {}]
  %s8 = inlined_call_operand.hbm [shape: f32[32,128], index: 8, kind: input, shape index: {}]
  %s9 = inlined_call_operand.vmem [shape: f32[1,128], index: 9, kind: input, shape index: {}]
  %s10 = inlined_call_operand.hbm [shape: f32[8,128], index: 10, kind: output, shape index: {0}]
  %s11 = inlined_call_operand.hbm [shape: f32[1,32], index: 11, kind: output, shape index: {1}]
  %s12 = inlined_call_operand.hbm [shape: f32[1,32], index: 12, kind: output, shape index: {2}]
  %13 = xla_tuple %s10, %s11, %s12
  %s14 = sld [smem:[#allocation0]]
  $region86: #{tpu_custom_call.1} parent=0
    _
  %s16 = ssub.s32 1, %s14
  %s17 = scalar_select 0, %s16, %s14
  $region1: #{tpu_custom_call.1} parent=0
    #allocation3 [shape = 'u8[4096]{0}', space=vmem, size = 0x1000, scoped, tag = 'input window, operand 0, single buffered']
    #allocation4 [shape = 's32[1]{0}', space=sflag, size = 0x4, scoped, tag = 'scoped memory for tpu_custom_call.1']
    #allocation5 [shape = 's32[1]{0}', space=sflag, size = 0x4, scoped, tag = 'scoped memory for tpu_custom_call.1']
    #allocation6 [shape = 'u8[512]{0}', space=vmem, size = 0x400, scoped, tag = 'input window, operand 1, single buffered']
    #allocation7 [shape = 's32[1]{0}', space=sflag, size = 0x4, scoped, tag = 'scoped memory for tpu_custom_call.1']
    #allocation8 [shape = 'u8[16384]{0}', space=vmem, size = 0x4000, scoped, tag = 'input window, operand 3, single buffered']
    #allocation9 [shape = 'u8[16384]{0}', space=vmem, size = 0x4000, scoped, tag = 'input window, operand 8, single buffered']
    #allocation10 [shape = 's32[1]{0}', space=sflag, size = 0x4, scoped, tag = 'scoped memory for tpu_custom_call.1']
    #allocation11 [shape = 'u8[4096]{0}', space=vmem, size = 0x1000, scoped, tag = 'output window, operand 0, single buffered']
    #allocation12 [shape = 'u8[512]{0}', space=vmem, size = 0x400, scoped, tag = 'output window, operand 1, single buffered']
    #allocation13 [shape = 's32[1]{0}', space=sflag, size = 0x4, scoped, tag = 'scoped memory for tpu_custom_call.1']
    #allocation14 [shape = 'u8[512]{0}', space=vmem, size = 0x400, scoped, tag = 'output window, operand 2, single buffered']
    %18 = vsyncpa [#allocation4], 0
    %19 = vsyncpa [#allocation7], 0
    %20 = vsyncpa [#allocation10], 0
    %21 = vsyncpa [#allocation5], 0
    %22 = vsyncpa [#allocation13], 0
    // Predicated region
    $region2: #{tpu_custom_call.1} parent=1 // pred_check
      _
    $region3: #{tpu_custom_call.1} parent=1 // pred_check_branch
      %24 = sbr.rel (0) target = $region5
    $region4: #{tpu_custom_call.1} parent=1 // pred_region
      %26 = vsyncadd [#allocation4], 0
      %s28 = sshll.u32 %s0, 4
      %s29 = int_to_ptr.hbm [resolvable:$true] %s28
      %s30 = sshll.u32 [#allocation3], 4
      %s31 = int_to_ptr.vmem [resolvable:$true] %s30
      %33 = dma.hbm_to_vmem [thread:$0]  %s29, 128, %s31, [#allocation4]
    $region5: #{tpu_custom_call.1} parent=1 // pred_fallthru
      _
    // Predicated region
    $region6: #{tpu_custom_call.1} parent=1 // pred_check
      _
    $region7: #{tpu_custom_call.1} parent=1 // pred_check_branch
      %35 = sbr.rel (0) target = $region9
    $region8: #{tpu_custom_call.1} parent=1 // pred_region
      %37 = vsyncadd [#allocation7], 0
      %s39 = sshll.u32 %s1, 4
      %s40 = int_to_ptr.hbm [resolvable:$true] %s39
      %s41 = sshll.u32 [#allocation6], 4
      %s42 = int_to_ptr.vmem [resolvable:$true] %s41
      %44 = dma.hbm_to_vmem [thread:$0]  %s40, 16, %s42, [#allocation7]
    $region9: #{tpu_custom_call.1} parent=1 // pred_fallthru
      _
    // Predicated region
    $region10: #{tpu_custom_call.1} parent=1 // pred_check
      _
    $region11: #{tpu_custom_call.1} parent=1 // pred_check_branch
      %46 = sbr.rel (0) target = $region13
    $region12: #{tpu_custom_call.1} parent=1 // pred_region
      _
    $region13: #{tpu_custom_call.1} parent=1 // pred_fallthru
      _
    // Predicated region
    $region14: #{tpu_custom_call.1} parent=1 // pred_check
      _
    $region15: #{tpu_custom_call.1} parent=1 // pred_check_branch
      %48 = sbr.rel (0) target = $region17
    $region16: #{tpu_custom_call.1} parent=1 // pred_region
      %50 = vsyncadd [#allocation7], 0
      %s51 = sshll.u32 %s3, 4
      %s52 = int_to_ptr.hbm [resolvable:$true] %s51
      %s53 = sshll.u32 [#allocation8], 4
      %s54 = int_to_ptr.vmem [resolvable:$true] %s53
      %59 = dma.hbm_to_vmem [thread:$0]  %s52, 512, %s54, [#allocation7], 128, 128, 8
    $region17: #{tpu_custom_call.1} parent=1 // pred_fallthru
      _
    // Predicated region
    $region18: #{tpu_custom_call.1} parent=1 // pred_check
      _
    $region19: #{tpu_custom_call.1} parent=1 // pred_check_branch
      %61 = sbr.rel (0) target = $region21
    $region20: #{tpu_custom_call.1} parent=1 // pred_region
      _
    $region21: #{tpu_custom_call.1} parent=1 // pred_fallthru
      _
    // Predicated region
    $region22: #{tpu_custom_call.1} parent=1 // pred_check
      _
    $region23: #{tpu_custom_call.1} parent=1 // pred_check_branch
      %63 = sbr.rel (0) target = $region25
    $region24: #{tpu_custom_call.1} parent=1 // pred_region
      _
    $region25: #{tpu_custom_call.1} parent=1 // pred_fallthru
      _
    // Predicated region
    $region26: #{tpu_custom_call.1} parent=1 // pred_check
      _
    $region27: #{tpu_custom_call.1} parent=1 // pred_check_branch
      %65 = sbr.rel (0) target = $region29
    $region28: #{tpu_custom_call.1} parent=1 // pred_region
      _
    $region29: #{tpu_custom_call.1} parent=1 // pred_fallthru
      _
    // Predicated region
    $region30: #{tpu_custom_call.1} parent=1 // pred_check
      _
    $region31: #{tpu_custom_call.1} parent=1 // pred_check_branch
      %67 = sbr.rel (0) target = $region33
    $region32: #{tpu_custom_call.1} parent=1 // pred_region
      _
    $region33: #{tpu_custom_call.1} parent=1 // pred_fallthru
      _
    // Predicated region
    $region34: #{tpu_custom_call.1} parent=1 // pred_check
      _
    $region35: #{tpu_custom_call.1} parent=1 // pred_check_branch
      %69 = sbr.rel (0) target = $region37
    $region36: #{tpu_custom_call.1} parent=1 // pred_region
      %71 = vsyncadd [#allocation10], 0
      %s72 = sshll.u32 %s8, 4
      %s73 = int_to_ptr.hbm [resolvable:$true] %s72
      %s74 = sshll.u32 [#allocation9], 4
      %s75 = int_to_ptr.vmem [resolvable:$true] %s74
      %80 = dma.hbm_to_vmem [thread:$0]  %s73, 512, %s75, [#allocation10], 128, 128, 8
    $region37: #{tpu_custom_call.1} parent=1 // pred_fallthru
      _
    // Predicated region
    $region38: #{tpu_custom_call.1} parent=1 // pred_check
      _
    $region39: #{tpu_custom_call.1} parent=1 // pred_check_branch
      %82 = sbr.rel (0) target = $region41
    $region40: #{tpu_custom_call.1} parent=1 // pred_region
      _
    $region41: #{tpu_custom_call.1} parent=1 // pred_fallthru
      _
    // Predicated region
    $region42: #{tpu_custom_call.1} parent=1 // pred_check
      _
    $region43: #{tpu_custom_call.1} parent=1 // pred_check_branch
      %84 = sbr.rel (0) target = $region45
    $region44: #{tpu_custom_call.1} parent=1 // pred_region
      %86 = dma.done [#allocation4], 128
    $region45: #{tpu_custom_call.1} parent=1 // pred_fallthru
      _
    // Predicated region
    $region46: #{tpu_custom_call.1} parent=1 // pred_check
      _
    $region47: #{tpu_custom_call.1} parent=1 // pred_check_branch
      %88 = sbr.rel (0) target = $region49
    $region48: #{tpu_custom_call.1} parent=1 // pred_region
      %90 = dma.done [#allocation7], 16
    $region49: #{tpu_custom_call.1} parent=1 // pred_fallthru
      _
    // Predicated region
    $region50: #{tpu_custom_call.1} parent=1 // pred_check
      _
    $region51: #{tpu_custom_call.1} parent=1 // pred_check_branch
      %92 = sbr.rel (0) target = $region53
    $region52: #{tpu_custom_call.1} parent=1 // pred_region
      %94 = dma.done [#allocation7], 512
    $region53: #{tpu_custom_call.1} parent=1 // pred_fallthru
      _
    // Predicated region
    $region54: #{tpu_custom_call.1} parent=1 // pred_check
      _
    $region55: #{tpu_custom_call.1} parent=1 // pred_check_branch
      %96 = sbr.rel (0) target = $region57
    $region56: #{tpu_custom_call.1} parent=1 // pred_region
      %98 = dma.done [#allocation10], 512
    $region57: #{tpu_custom_call.1} parent=1 // pred_fallthru
      _
    %p99 = scmp.eq.s32.totalorder 0, 0
    // Predicated region
    $region58: #{tpu_custom_call.1} parent=1 // pred_check
      %p100 = pneg %p99
    $region59: #{tpu_custom_call.1} parent=1 // pred_check_branch
      %102 = sbr.rel (%p100) target = $region61
    $region60: #{tpu_custom_call.1} parent=1 // pred_region
      %v103 = vld [vmem:[#allocation6] sm:$0x1]
      %vm104 = vcmask 253952
      %105 = vst.msk [vmem:[#allocation12] sm:$0x1] %vm104, %v103
      %v106 = vld [vmem:[%s2] sm:$0x1]
      %107 = vst.msk [vmem:[#allocation14] sm:$0x1] %vm104, %v106
    $region61: #{tpu_custom_call.1} parent=1 // pred_fallthru
      _
    %v108 = vld [vmem:[#allocation12] sm:$0x1]
    %v109 = vld [vmem:[#allocation14] sm:$0x1]
    %v110 = vld [vmem:[#allocation8] sm:$0xff]
    %v111 = vld [vmem:[#allocation8 + $0x8] sm:$0xff]
    %v112 = vld [vmem:[#allocation8 + $0x10] sm:$0xff]
    %v113 = vld [vmem:[#allocation8 + $0x18] sm:$0xff]
    %v114 = vld [vmem:[%s4] sm:$0x1]
    %v115 = vld [vmem:[%s5] sm:$0x1]
    %v116 = vld [vmem:[%s6] sm:$0x1]
    %v117 = vld [vmem:[%s7] sm:$0x1]
    %v118 = vlaneseq
    %v119 = vand.u32 %v118, 127
    %vm120 = vcmp.ge.s32.totalorder %v119, 96
    %v121 = vld [vmem:[#allocation3] sm:$0x1]
    %vm122 = vcmask 261120
    %v124 = vsel %vm122, %v108, 0
    %126 = vmatpush.msra.mxu0 0.0
    %127 = vmatpush.msra.mxu0 0.0
    %128 = vmatpush.msra.mxu0 0.0
    %129 = vmatpush.msra.mxu0 0.0
    %130 = vmatpush.msra.mxu0 0.0
    %131 = vmatpush.msra.mxu0 0.0
    %132 = vmatpush.msra.mxu0 0.0
    %133 = vmatpush.msra.mxu0 0.0
    %134 = vmatpush.msra.mxu0 0.0
    %135 = vmatpush.msra.mxu0 0.0
    %136 = vmatpush.msra.mxu0 0.0
    %137 = vmatpush.msra.mxu0 0.0
    %138 = vmatpush.msra.mxu0 %v113
    %139 = vmatpush.msra.mxu0 %v112
    %140 = vmatpush.msra.mxu0 %v111
    %141 = vmatpush.msra.mxu0 %v110
    %142 = vmatmul.f32.gmra.mxu0 %v124
    %v143 = vpop.f32.mrf.mxu0
    %v144 = vadd.f32 %v114, %v143
    %145 = vdwg.mxu0
    %v146 = vmul.f32 %v115, %v121
    %v147 = vmul.f32 %v146, %v144
    %v148 = vmul.f32 %v116, %v121
    %v149 = vadd.f32 %v147, %v148
    %v150 = vmul.f32 %v117, %v144
    %v151 = vadd.f32 %v149, %v150
    %v152 = vmul.f32 %v151, 2.0
    %v153 = vsel %vm120, %v152, %v151
    %v154 = vxor.u32 %v153, 2147483648
    %v155 = vmul.f32 %v154, 1.442695
    %v156 = vpow.pop %v155
    %v157 = vadd.f32 %v156, 1.0
    %v158 = vrcp.pop %v157
    %v159 = vmul.f32 %v157, %v158
    %v160 = vsub.f32 1.0, %v159
    %v161 = vmul.f32 %v158, %v160
    %v162 = vadd.f32 %v158, %v161
    %vm163 = vweird.f32 %v157
    %vm164 = vweird.f32 %v158
    %vm165 = vmor %vm163, %vm164
    %v166 = vsel %vm165, %v158, %v162
    %v167 = vand.u32 2147483647, %v157
    %vm168 = vcmp.eq.f32.partialorder %v167, 8.507059e+37
    %v169 = vand.u32 %v157, 2147483648
    %v170 = vor.u32 1.1754944e-38, %v169
    %v171 = vsel %vm168, %v170, %v166
    %v172 = vmul.f32 1.0, %v171
    %v173 = vmul.f32 %v172, 2.0
    %v174 = vsub.f32 %v173, 1.0
    %v175 = vsel %vm120, %v174, %v172
    %v176 = vmul.f32 %v175, %v109
    %178 = vrot.lane.b32.xlu0 %v175, 64
    %v179 = vpop.permute.xlu0 %178
    %v181 = vmul.f32 %v175, %v179
    %183 = vrot.lane.b32.xlu0 %v181, 96
    %v184 = vpop.permute.xlu0 %183
    %v186 = vadd.f32 %v176, %v184
    %v187 = vtanh.pop %v186
    %189 = vrot.lane.b32.xlu0 %v187, 64
    %v190 = vpop.permute.xlu0 %189
    %v192 = vmul.f32 %v175, %v190
    %194 = vrot.lane.b32.xlu0 %v192, 64
    %v195 = vpop.permute.xlu0 %194
    %vm197 = vcmask 253952
    %198 = vst.msk [vmem:[#allocation2] sm:$0x1] %vm197, %v195
    %v199 = vld [vmem:[#allocation3 + $0x1] sm:$0x1]
    %v200 = vsel %vm122, %v195, 0
    %202 = vmatpush.msra.mxu0 0.0
    %203 = vmatpush.msra.mxu0 0.0
    %204 = vmatpush.msra.mxu0 0.0
    %205 = vmatpush.msra.mxu0 0.0
    %206 = vmatpush.msra.mxu0 0.0
    %207 = vmatpush.msra.mxu0 0.0
    %208 = vmatpush.msra.mxu0 0.0
    %209 = vmatpush.msra.mxu0 0.0
    %210 = vmatpush.msra.mxu0 0.0
    %211 = vmatpush.msra.mxu0 0.0
    %212 = vmatpush.msra.mxu0 0.0
    %213 = vmatpush.msra.mxu0 0.0
    %214 = vmatpush.msra.mxu0 %v113
    %215 = vmatpush.msra.mxu0 %v112
    %216 = vmatpush.msra.mxu0 %v111
    %217 = vmatpush.msra.mxu0 %v110
    %218 = vmatmul.f32.gmra.mxu0 %v200
    %v219 = vpop.f32.mrf.mxu0
    %v220 = vadd.f32 %v114, %v219
    %221 = vdwg.mxu0
    %v222 = vmul.f32 %v115, %v199
    %v223 = vmul.f32 %v222, %v220
    %v224 = vmul.f32 %v116, %v199
    %v225 = vadd.f32 %v223, %v224
    %v226 = vmul.f32 %v117, %v220
    %v227 = vadd.f32 %v225, %v226
    %v228 = vmul.f32 %v227, 2.0
    %v229 = vsel %vm120, %v228, %v227
    %v230 = vxor.u32 %v229, 2147483648
    %v231 = vmul.f32 %v230, 1.442695
    %v232 = vpow.pop %v231
    %v233 = vadd.f32 %v232, 1.0
    %v234 = vrcp.pop %v233
    %v235 = vmul.f32 %v233, %v234
    %v236 = vsub.f32 1.0, %v235
    %v237 = vmul.f32 %v234, %v236
    %v238 = vadd.f32 %v234, %v237
    %vm239 = vweird.f32 %v233
    %vm240 = vweird.f32 %v234
    %vm241 = vmor %vm239, %vm240
    %v242 = vsel %vm241, %v234, %v238
    %v243 = vand.u32 2147483647, %v233
    %vm244 = vcmp.eq.f32.partialorder %v243, 8.507059e+37
    %v245 = vand.u32 %v233, 2147483648
    %v246 = vor.u32 1.1754944e-38, %v245
    %v247 = vsel %vm244, %v246, %v242
    %v248 = vmul.f32 1.0, %v247
    %v249 = vmul.f32 %v248, 2.0
    %v250 = vsub.f32 %v249, 1.0
    %v251 = vsel %vm120, %v250, %v248
    %v252 = vmul.f32 %v251, %v186
    %254 = vrot.lane.b32.xlu0 %v251, 64
    %v255 = vpop.permute.xlu0 %254
    %v257 = vmul.f32 %v251, %v255
    %259 = vrot.lane.b32.xlu0 %v257, 96
    %v260 = vpop.permute.xlu0 %259
    %v262 = vadd.f32 %v252, %v260
    %v263 = vtanh.pop %v262
    %265 = vrot.lane.b32.xlu0 %v263, 64
    %v266 = vpop.permute.xlu0 %265
    %v268 = vmul.f32 %v251, %v266
    %270 = vrot.lane.b32.xlu0 %v268, 64
    %v271 = vpop.permute.xlu0 %270
    %273 = vst.msk [vmem:[#allocation2 + $0x1] sm:$0x1] %vm197, %v271
    %v274 = vld [vmem:[#allocation3 + $0x2] sm:$0x1]
    %v275 = vsel %vm122, %v271, 0
    %277 = vmatpush.msra.mxu0 0.0
    %278 = vmatpush.msra.mxu0 0.0
    %279 = vmatpush.msra.mxu0 0.0
    %280 = vmatpush.msra.mxu0 0.0
    %281 = vmatpush.msra.mxu0 0.0
    %282 = vmatpush.msra.mxu0 0.0
    %283 = vmatpush.msra.mxu0 0.0
    %284 = vmatpush.msra.mxu0 0.0
    %285 = vmatpush.msra.mxu0 0.0
    %286 = vmatpush.msra.mxu0 0.0
    %287 = vmatpush.msra.mxu0 0.0
    %288 = vmatpush.msra.mxu0 0.0
    %289 = vmatpush.msra.mxu0 %v113
    %290 = vmatpush.msra.mxu0 %v112
    %291 = vmatpush.msra.mxu0 %v111
    %292 = vmatpush.msra.mxu0 %v110
    %293 = vmatmul.f32.gmra.mxu0 %v275
    %v294 = vpop.f32.mrf.mxu0
    %v295 = vadd.f32 %v114, %v294
    %296 = vdwg.mxu0
    %v297 = vmul.f32 %v115, %v274
    %v298 = vmul.f32 %v297, %v295
    %v299 = vmul.f32 %v116, %v274
    %v300 = vadd.f32 %v298, %v299
    %v301 = vmul.f32 %v117, %v295
    %v302 = vadd.f32 %v300, %v301
    %v303 = vmul.f32 %v302, 2.0
    %v304 = vsel %vm120, %v303, %v302
    %v305 = vxor.u32 %v304, 2147483648
    %v306 = vmul.f32 %v305, 1.442695
    %v307 = vpow.pop %v306
    %v308 = vadd.f32 %v307, 1.0
    %v309 = vrcp.pop %v308
    %v310 = vmul.f32 %v308, %v309
    %v311 = vsub.f32 1.0, %v310
    %v312 = vmul.f32 %v309, %v311
    %v313 = vadd.f32 %v309, %v312
    %vm314 = vweird.f32 %v308
    %vm315 = vweird.f32 %v309
    %vm316 = vmor %vm314, %vm315
    %v317 = vsel %vm316, %v309, %v313
    %v318 = vand.u32 2147483647, %v308
    %vm319 = vcmp.eq.f32.partialorder %v318, 8.507059e+37
    %v320 = vand.u32 %v308, 2147483648
    %v321 = vor.u32 1.1754944e-38, %v320
    %v322 = vsel %vm319, %v321, %v317
    %v323 = vmul.f32 1.0, %v322
    %v324 = vmul.f32 %v323, 2.0
    %v325 = vsub.f32 %v324, 1.0
    %v326 = vsel %vm120, %v325, %v323
    %v327 = vmul.f32 %v326, %v262
    %329 = vrot.lane.b32.xlu0 %v326, 64
    %v330 = vpop.permute.xlu0 %329
    %v332 = vmul.f32 %v326, %v330
    %334 = vrot.lane.b32.xlu0 %v332, 96
    %v335 = vpop.permute.xlu0 %334
    %v337 = vadd.f32 %v327, %v335
    %v338 = vtanh.pop %v337
    %340 = vrot.lane.b32.xlu0 %v338, 64
    %v341 = vpop.permute.xlu0 %340
    %v343 = vmul.f32 %v326, %v341
    %345 = vrot.lane.b32.xlu0 %v343, 64
    %v346 = vpop.permute.xlu0 %345
    %348 = vst.msk [vmem:[#allocation2 + $0x2] sm:$0x1] %vm197, %v346
    %v349 = vld [vmem:[#allocation3 + $0x3] sm:$0x1]
    %v350 = vsel %vm122, %v346, 0
    %352 = vmatpush.msra.mxu0 0.0
    %353 = vmatpush.msra.mxu0 0.0
    %354 = vmatpush.msra.mxu0 0.0
    %355 = vmatpush.msra.mxu0 0.0
    %356 = vmatpush.msra.mxu0 0.0
    %357 = vmatpush.msra.mxu0 0.0
    %358 = vmatpush.msra.mxu0 0.0
    %359 = vmatpush.msra.mxu0 0.0
    %360 = vmatpush.msra.mxu0 0.0
    %361 = vmatpush.msra.mxu0 0.0
    %362 = vmatpush.msra.mxu0 0.0
    %363 = vmatpush.msra.mxu0 0.0
    %364 = vmatpush.msra.mxu0 %v113
    %365 = vmatpush.msra.mxu0 %v112
    %366 = vmatpush.msra.mxu0 %v111
    %367 = vmatpush.msra.mxu0 %v110
    %368 = vmatmul.f32.gmra.mxu0 %v350
    %v369 = vpop.f32.mrf.mxu0
    %v370 = vadd.f32 %v114, %v369
    %371 = vdwg.mxu0
    %v372 = vmul.f32 %v115, %v349
    %v373 = vmul.f32 %v372, %v370
    %v374 = vmul.f32 %v116, %v349
    %v375 = vadd.f32 %v373, %v374
    %v376 = vmul.f32 %v117, %v370
    %v377 = vadd.f32 %v375, %v376
    %v378 = vmul.f32 %v377, 2.0
    %v379 = vsel %vm120, %v378, %v377
    %v380 = vxor.u32 %v379, 2147483648
    %v381 = vmul.f32 %v380, 1.442695
    %v382 = vpow.pop %v381
    %v383 = vadd.f32 %v382, 1.0
    %v384 = vrcp.pop %v383
    %v385 = vmul.f32 %v383, %v384
    %v386 = vsub.f32 1.0, %v385
    %v387 = vmul.f32 %v384, %v386
    %v388 = vadd.f32 %v384, %v387
    %vm389 = vweird.f32 %v383
    %vm390 = vweird.f32 %v384
    %vm391 = vmor %vm389, %vm390
    %v392 = vsel %vm391, %v384, %v388
    %v393 = vand.u32 2147483647, %v383
    %vm394 = vcmp.eq.f32.partialorder %v393, 8.507059e+37
    %v395 = vand.u32 %v383, 2147483648
    %v396 = vor.u32 1.1754944e-38, %v395
    %v397 = vsel %vm394, %v396, %v392
    %v398 = vmul.f32 1.0, %v397
    %v399 = vmul.f32 %v398, 2.0
    %v400 = vsub.f32 %v399, 1.0
    %v401 = vsel %vm120, %v400, %v398
    %v402 = vmul.f32 %v401, %v337
    %404 = vrot.lane.b32.xlu0 %v401, 64
    %v405 = vpop.permute.xlu0 %404
    %v407 = vmul.f32 %v401, %v405
    %409 = vrot.lane.b32.xlu0 %v407, 96
    %v410 = vpop.permute.xlu0 %409
    %v412 = vadd.f32 %v402, %v410
    %v413 = vtanh.pop %v412
    %415 = vrot.lane.b32.xlu0 %v413, 64
    %v416 = vpop.permute.xlu0 %415
    %v418 = vmul.f32 %v401, %v416
    %420 = vrot.lane.b32.xlu0 %v418, 64
    %v421 = vpop.permute.xlu0 %420
    %423 = vst.msk [vmem:[#allocation2 + $0x3] sm:$0x1] %vm197, %v421
    %v424 = vld [vmem:[#allocation3 + $0x4] sm:$0x1]
    %v425 = vsel %vm122, %v421, 0
    %427 = vmatpush.msra.mxu0 0.0
    %428 = vmatpush.msra.mxu0 0.0
    %429 = vmatpush.msra.mxu0 0.0
    %430 = vmatpush.msra.mxu0 0.0
    %431 = vmatpush.msra.mxu0 0.0
    %432 = vmatpush.msra.mxu0 0.0
    %433 = vmatpush.msra.mxu0 0.0
    %434 = vmatpush.msra.mxu0 0.0
    %435 = vmatpush.msra.mxu0 0.0
    %436 = vmatpush.msra.mxu0 0.0
    %437 = vmatpush.msra.mxu0 0.0
    %438 = vmatpush.msra.mxu0 0.0
    %439 = vmatpush.msra.mxu0 %v113
    %440 = vmatpush.msra.mxu0 %v112
    %441 = vmatpush.msra.mxu0 %v111
    %442 = vmatpush.msra.mxu0 %v110
    %443 = vmatmul.f32.gmra.mxu0 %v425
    %v444 = vpop.f32.mrf.mxu0
    %v445 = vadd.f32 %v114, %v444
    %446 = vdwg.mxu0
    %v447 = vmul.f32 %v115, %v424
    %v448 = vmul.f32 %v447, %v445
    %v449 = vmul.f32 %v116, %v424
    %v450 = vadd.f32 %v448, %v449
    %v451 = vmul.f32 %v117, %v445
    %v452 = vadd.f32 %v450, %v451
    %v453 = vmul.f32 %v452, 2.0
    %v454 = vsel %vm120, %v453, %v452
    %v455 = vxor.u32 %v454, 2147483648
    %v456 = vmul.f32 %v455, 1.442695
    %v457 = vpow.pop %v456
    %v458 = vadd.f32 %v457, 1.0
    %v459 = vrcp.pop %v458
    %v460 = vmul.f32 %v458, %v459
    %v461 = vsub.f32 1.0, %v460
    %v462 = vmul.f32 %v459, %v461
    %v463 = vadd.f32 %v459, %v462
    %vm464 = vweird.f32 %v458
    %vm465 = vweird.f32 %v459
    %vm466 = vmor %vm464, %vm465
    %v467 = vsel %vm466, %v459, %v463
    %v468 = vand.u32 2147483647, %v458
    %vm469 = vcmp.eq.f32.partialorder %v468, 8.507059e+37
    %v470 = vand.u32 %v458, 2147483648
    %v471 = vor.u32 1.1754944e-38, %v470
    %v472 = vsel %vm469, %v471, %v467
    %v473 = vmul.f32 1.0, %v472
    %v474 = vmul.f32 %v473, 2.0
    %v475 = vsub.f32 %v474, 1.0
    %v476 = vsel %vm120, %v475, %v473
    %v477 = vmul.f32 %v476, %v412
    %479 = vrot.lane.b32.xlu0 %v476, 64
    %v480 = vpop.permute.xlu0 %479
    %v482 = vmul.f32 %v476, %v480
    %484 = vrot.lane.b32.xlu0 %v482, 96
    %v485 = vpop.permute.xlu0 %484
    %v487 = vadd.f32 %v477, %v485
    %v488 = vtanh.pop %v487
    %490 = vrot.lane.b32.xlu0 %v488, 64
    %v491 = vpop.permute.xlu0 %490
    %v493 = vmul.f32 %v476, %v491
    %495 = vrot.lane.b32.xlu0 %v493, 64
    %v496 = vpop.permute.xlu0 %495
    %498 = vst.msk [vmem:[#allocation2 + $0x4] sm:$0x1] %vm197, %v496
    %v499 = vld [vmem:[#allocation3 + $0x5] sm:$0x1]
    %v500 = vsel %vm122, %v496, 0
    %502 = vmatpush.msra.mxu0 0.0
    %503 = vmatpush.msra.mxu0 0.0
    %504 = vmatpush.msra.mxu0 0.0
    %505 = vmatpush.msra.mxu0 0.0
    %506 = vmatpush.msra.mxu0 0.0
    %507 = vmatpush.msra.mxu0 0.0
    %508 = vmatpush.msra.mxu0 0.0
    %509 = vmatpush.msra.mxu0 0.0
    %510 = vmatpush.msra.mxu0 0.0
    %511 = vmatpush.msra.mxu0 0.0
    %512 = vmatpush.msra.mxu0 0.0
    %513 = vmatpush.msra.mxu0 0.0
    %514 = vmatpush.msra.mxu0 %v113
    %515 = vmatpush.msra.mxu0 %v112
    %516 = vmatpush.msra.mxu0 %v111
    %517 = vmatpush.msra.mxu0 %v110
    %518 = vmatmul.f32.gmra.mxu0 %v500
    %v519 = vpop.f32.mrf.mxu0
    %v520 = vadd.f32 %v114, %v519
    %521 = vdwg.mxu0
    %v522 = vmul.f32 %v115, %v499
    %v523 = vmul.f32 %v522, %v520
    %v524 = vmul.f32 %v116, %v499
    %v525 = vadd.f32 %v523, %v524
    %v526 = vmul.f32 %v117, %v520
    %v527 = vadd.f32 %v525, %v526
    %v528 = vmul.f32 %v527, 2.0
    %v529 = vsel %vm120, %v528, %v527
    %v530 = vxor.u32 %v529, 2147483648
    %v531 = vmul.f32 %v530, 1.442695
    %v532 = vpow.pop %v531
    %v533 = vadd.f32 %v532, 1.0
    %v534 = vrcp.pop %v533
    %v535 = vmul.f32 %v533, %v534
    %v536 = vsub.f32 1.0, %v535
    %v537 = vmul.f32 %v534, %v536
    %v538 = vadd.f32 %v534, %v537
    %vm539 = vweird.f32 %v533
    %vm540 = vweird.f32 %v534
    %vm541 = vmor %vm539, %vm540
    %v542 = vsel %vm541, %v534, %v538
    %v543 = vand.u32 2147483647, %v533
    %vm544 = vcmp.eq.f32.partialorder %v543, 8.507059e+37
    %v545 = vand.u32 %v533, 2147483648
    %v546 = vor.u32 1.1754944e-38, %v545
    %v547 = vsel %vm544, %v546, %v542
    %v548 = vmul.f32 1.0, %v547
    %v549 = vmul.f32 %v548, 2.0
    %v550 = vsub.f32 %v549, 1.0
    %v551 = vsel %vm120, %v550, %v548
    %v552 = vmul.f32 %v551, %v487
    %554 = vrot.lane.b32.xlu0 %v551, 64
    %v555 = vpop.permute.xlu0 %554
    %v557 = vmul.f32 %v551, %v555
    %559 = vrot.lane.b32.xlu0 %v557, 96
    %v560 = vpop.permute.xlu0 %559
    %v562 = vadd.f32 %v552, %v560
    %v563 = vtanh.pop %v562
    %565 = vrot.lane.b32.xlu0 %v563, 64
    %v566 = vpop.permute.xlu0 %565
    %v568 = vmul.f32 %v551, %v566
    %570 = vrot.lane.b32.xlu0 %v568, 64
    %v571 = vpop.permute.xlu0 %570
    %573 = vst.msk [vmem:[#allocation2 + $0x5] sm:$0x1] %vm197, %v571
    %v574 = vld [vmem:[#allocation3 + $0x6] sm:$0x1]
    %v575 = vsel %vm122, %v571, 0
    %577 = vmatpush.msra.mxu0 0.0
    %578 = vmatpush.msra.mxu0 0.0
    %579 = vmatpush.msra.mxu0 0.0
    %580 = vmatpush.msra.mxu0 0.0
    %581 = vmatpush.msra.mxu0 0.0
    %582 = vmatpush.msra.mxu0 0.0
    %583 = vmatpush.msra.mxu0 0.0
    %584 = vmatpush.msra.mxu0 0.0
    %585 = vmatpush.msra.mxu0 0.0
    %586 = vmatpush.msra.mxu0 0.0
    %587 = vmatpush.msra.mxu0 0.0
    %588 = vmatpush.msra.mxu0 0.0
    %589 = vmatpush.msra.mxu0 %v113
    %590 = vmatpush.msra.mxu0 %v112
    %591 = vmatpush.msra.mxu0 %v111
    %592 = vmatpush.msra.mxu0 %v110
    %593 = vmatmul.f32.gmra.mxu0 %v575
    %v594 = vpop.f32.mrf.mxu0
    %v595 = vadd.f32 %v114, %v594
    %596 = vdwg.mxu0
    %v597 = vmul.f32 %v115, %v574
    %v598 = vmul.f32 %v597, %v595
    %v599 = vmul.f32 %v116, %v574
    %v600 = vadd.f32 %v598, %v599
    %v601 = vmul.f32 %v117, %v595
    %v602 = vadd.f32 %v600, %v601
    %v603 = vmul.f32 %v602, 2.0
    %v604 = vsel %vm120, %v603, %v602
    %v605 = vxor.u32 %v604, 2147483648
    %v606 = vmul.f32 %v605, 1.442695
    %v607 = vpow.pop %v606
    %v608 = vadd.f32 %v607, 1.0
    %v609 = vrcp.pop %v608
    %v610 = vmul.f32 %v608, %v609
    %v611 = vsub.f32 1.0, %v610
    %v612 = vmul.f32 %v609, %v611
    %v613 = vadd.f32 %v609, %v612
    %vm614 = vweird.f32 %v608
    %vm615 = vweird.f32 %v609
    %vm616 = vmor %vm614, %vm615
    %v617 = vsel %vm616, %v609, %v613
    %v618 = vand.u32 2147483647, %v608
    %vm619 = vcmp.eq.f32.partialorder %v618, 8.507059e+37
    %v620 = vand.u32 %v608, 2147483648
    %v621 = vor.u32 1.1754944e-38, %v620
    %v622 = vsel %vm619, %v621, %v617
    %v623 = vmul.f32 1.0, %v622
    %v624 = vmul.f32 %v623, 2.0
    %v625 = vsub.f32 %v624, 1.0
    %v626 = vsel %vm120, %v625, %v623
    %v627 = vmul.f32 %v626, %v562
    %629 = vrot.lane.b32.xlu0 %v626, 64
    %v630 = vpop.permute.xlu0 %629
    %v632 = vmul.f32 %v626, %v630
    %634 = vrot.lane.b32.xlu0 %v632, 96
    %v635 = vpop.permute.xlu0 %634
    %v637 = vadd.f32 %v627, %v635
    %v638 = vtanh.pop %v637
    %640 = vrot.lane.b32.xlu0 %v638, 64
    %v641 = vpop.permute.xlu0 %640
    %v643 = vmul.f32 %v626, %v641
    %645 = vrot.lane.b32.xlu0 %v643, 64
    %v646 = vpop.permute.xlu0 %645
    %648 = vst.msk [vmem:[#allocation2 + $0x6] sm:$0x1] %vm197, %v646
    %v649 = vld [vmem:[#allocation3 + $0x7] sm:$0x1]
    %v650 = vsel %vm122, %v646, 0
    %652 = vmatpush.msra.mxu0 0.0
    %653 = vmatpush.msra.mxu0 0.0
    %654 = vmatpush.msra.mxu0 0.0
    %655 = vmatpush.msra.mxu0 0.0
    %656 = vmatpush.msra.mxu0 0.0
    %657 = vmatpush.msra.mxu0 0.0
    %658 = vmatpush.msra.mxu0 0.0
    %659 = vmatpush.msra.mxu0 0.0
    %660 = vmatpush.msra.mxu0 0.0
    %661 = vmatpush.msra.mxu0 0.0
    %662 = vmatpush.msra.mxu0 0.0
    %663 = vmatpush.msra.mxu0 0.0
    %664 = vmatpush.msra.mxu0 %v113
    %665 = vmatpush.msra.mxu0 %v112
    %666 = vmatpush.msra.mxu0 %v111
    %667 = vmatpush.msra.mxu0 %v110
    %668 = vmatmul.f32.gmra.mxu0 %v650
    %v669 = vpop.f32.mrf.mxu0
    %v670 = vadd.f32 %v114, %v669
    %671 = vdwg.mxu0
    %v672 = vmul.f32 %v115, %v649
    %v673 = vmul.f32 %v672, %v670
    %v674 = vmul.f32 %v116, %v649
    %v675 = vadd.f32 %v673, %v674
    %v676 = vmul.f32 %v117, %v670
    %v677 = vadd.f32 %v675, %v676
    %v678 = vmul.f32 %v677, 2.0
    %v679 = vsel %vm120, %v678, %v677
    %v680 = vxor.u32 %v679, 2147483648
    %v681 = vmul.f32 %v680, 1.442695
    %v682 = vpow.pop %v681
    %v683 = vadd.f32 %v682, 1.0
    %v684 = vrcp.pop %v683
    %v685 = vmul.f32 %v683, %v684
    %v686 = vsub.f32 1.0, %v685
    %v687 = vmul.f32 %v684, %v686
    %v688 = vadd.f32 %v684, %v687
    %vm689 = vweird.f32 %v683
    %vm690 = vweird.f32 %v684
    %vm691 = vmor %vm689, %vm690
    %v692 = vsel %vm691, %v684, %v688
    %v693 = vand.u32 2147483647, %v683
    %vm694 = vcmp.eq.f32.partialorder %v693, 8.507059e+37
    %v695 = vand.u32 %v683, 2147483648
    %v696 = vor.u32 1.1754944e-38, %v695
    %v697 = vsel %vm694, %v696, %v692
    %v698 = vmul.f32 1.0, %v697
    %v699 = vmul.f32 %v698, 2.0
    %v700 = vsub.f32 %v699, 1.0
    %v701 = vsel %vm120, %v700, %v698
    %v702 = vmul.f32 %v701, %v637
    %704 = vrot.lane.b32.xlu0 %v701, 64
    %v705 = vpop.permute.xlu0 %704
    %v707 = vmul.f32 %v701, %v705
    %709 = vrot.lane.b32.xlu0 %v707, 96
    %v710 = vpop.permute.xlu0 %709
    %v712 = vadd.f32 %v702, %v710
    %v713 = vtanh.pop %v712
    %715 = vrot.lane.b32.xlu0 %v713, 64
    %v716 = vpop.permute.xlu0 %715
    %v718 = vmul.f32 %v701, %v716
    %720 = vrot.lane.b32.xlu0 %v718, 64
    %v721 = vpop.permute.xlu0 %720
    %723 = vst.msk [vmem:[#allocation2 + $0x7] sm:$0x1] %vm197, %v721
    %724 = vst.msk [vmem:[#allocation12] sm:$0x1] %vm197, %v721
    %725 = vst.msk [vmem:[#allocation14] sm:$0x1] %vm197, %v712
    %v726 = vld [vmem:[#allocation2] sm:$0xff]
    %v727 = vld [vmem:[#allocation9] sm:$0xff]
    %v728 = vld [vmem:[#allocation9 + $0x8] sm:$0xff]
    %v729 = vld [vmem:[#allocation9 + $0x10] sm:$0xff]
    %v730 = vld [vmem:[#allocation9 + $0x18] sm:$0xff]
    %v731 = vld [vmem:[%s9] sm:$0x1]
    %v733 = vperm.slane %v731, 0
    %v736 = vsel %vm122, %v726, 0
    %738 = vmatpush.msra.mxu0 0.0
    %739 = vmatpush.msra.mxu0 0.0
    %740 = vmatpush.msra.mxu0 0.0
    %741 = vmatpush.msra.mxu0 0.0
    %742 = vmatpush.msra.mxu0 0.0
    %743 = vmatpush.msra.mxu0 0.0
    %744 = vmatpush.msra.mxu0 0.0
    %745 = vmatpush.msra.mxu0 0.0
    %746 = vmatpush.msra.mxu0 0.0
    %747 = vmatpush.msra.mxu0 0.0
    %748 = vmatpush.msra.mxu0 0.0
    %749 = vmatpush.msra.mxu0 0.0
    %750 = vmatpush.msra.mxu0 %v730
    %751 = vmatpush.msra.mxu0 %v729
    %752 = vmatpush.msra.mxu0 %v728
    %753 = vmatpush.msra.mxu0 %v727
    %754 = vmatmul.f32.gmra.mxu0 %v736
    %v755 = vpop.f32.mrf.mxu0
    %v756 = vadd.f32 %v733, %v755
    %757 = vdwg.mxu0
    %758 = vst [vmem:[#allocation11] sm:$0xff] %v756
    // Predicated region
    $region62: #{tpu_custom_call.1} parent=1 // pred_check
      _
    $region63: #{tpu_custom_call.1} parent=1 // pred_check_branch
      %760 = sbr.rel (0) target = $region65
    $region64: #{tpu_custom_call.1} parent=1 // pred_region
      %762 = vsyncadd [#allocation5], 0
      %s764 = sshll.u32 [#allocation11], 4
      %s765 = int_to_ptr.vmem [resolvable:$true] %s764
      %s766 = sshll.u32 %s10, 4
      %s767 = int_to_ptr.hbm [resolvable:$true] %s766
      %769 = dma.vmem_to_hbm [thread:$0]  %s765, 128, %s767, [#allocation5]
    $region65: #{tpu_custom_call.1} parent=1 // pred_fallthru
      _
    // Predicated region
    $region66: #{tpu_custom_call.1} parent=1 // pred_check
      _
    $region67: #{tpu_custom_call.1} parent=1 // pred_check_branch
      %771 = sbr.rel (0) target = $region69
    $region68: #{tpu_custom_call.1} parent=1 // pred_region
      %773 = vsyncadd [#allocation13], 0
      %s775 = sshll.u32 [#allocation12], 4
      %s776 = int_to_ptr.vmem [resolvable:$true] %s775
      %s777 = sshll.u32 %s11, 4
      %s778 = int_to_ptr.hbm [resolvable:$true] %s777
      %780 = dma.vmem_to_hbm [thread:$0]  %s776, 16, %s778, [#allocation13]
    $region69: #{tpu_custom_call.1} parent=1 // pred_fallthru
      _
    // Predicated region
    $region70: #{tpu_custom_call.1} parent=1 // pred_check
      _
    $region71: #{tpu_custom_call.1} parent=1 // pred_check_branch
      %782 = sbr.rel (0) target = $region73
    $region72: #{tpu_custom_call.1} parent=1 // pred_region
      %784 = vsyncadd [#allocation13], 0
      %s786 = sshll.u32 [#allocation14], 4
      %s787 = int_to_ptr.vmem [resolvable:$true] %s786
      %s788 = sshll.u32 %s12, 4
      %s789 = int_to_ptr.hbm [resolvable:$true] %s788
      %791 = dma.vmem_to_hbm [thread:$0]  %s787, 16, %s789, [#allocation13]
    $region73: #{tpu_custom_call.1} parent=1 // pred_fallthru
      _
    // Predicated region
    $region74: #{tpu_custom_call.1} parent=1 // pred_check
      _
    $region75: #{tpu_custom_call.1} parent=1 // pred_check_branch
      %793 = sbr.rel (0) target = $region77
    $region76: #{tpu_custom_call.1} parent=1 // pred_region
      %795 = dma.done [#allocation5], 128
    $region77: #{tpu_custom_call.1} parent=1 // pred_fallthru
      _
    // Predicated region
    $region78: #{tpu_custom_call.1} parent=1 // pred_check
      _
    $region79: #{tpu_custom_call.1} parent=1 // pred_check_branch
      %797 = sbr.rel (0) target = $region81
    $region80: #{tpu_custom_call.1} parent=1 // pred_region
      %799 = dma.done [#allocation13], 16
    $region81: #{tpu_custom_call.1} parent=1 // pred_fallthru
      _
    // Predicated region
    $region82: #{tpu_custom_call.1} parent=1 // pred_check
      _
    $region83: #{tpu_custom_call.1} parent=1 // pred_check_branch
      %801 = sbr.rel (0) target = $region85
    $region84: #{tpu_custom_call.1} parent=1 // pred_region
      %803 = dma.done [#allocation13], 16
    $region85: #{tpu_custom_call.1} parent=1 // pred_fallthru
      _
    %804 = vsyncpa [#allocation4], 1
    %805 = vsyncpa [#allocation7], 1
    %806 = vsyncpa [#allocation10], 1
    %807 = vsyncpa [#allocation5], 1
    %808 = vsyncpa [#allocation13], 1

</llo_original>
